<compile_context>
chip_gen: v5e
topology: v5e:2x2
jax: 0.10.0
libtpu: 0.0.40
codegen_flags: <defaults>
</compile_context>

<pallas_src>
import functools
import math

import numpy as np
import jax
import jax.numpy as jnp
from jax.experimental import pallas as pl
from jax.experimental.pallas import tpu as pltpu


# ----------------------------------------------------------------------------
# Cox-de Boor B-spline basis on the uniform extended grid over [-1, 1].
# Boundary step functions (x >= t_j) are computed once; degree-0 windows are
# cmp_j - cmp_{j+1} (half-open [t_j, t_{j+1}) like pykan).  The recursion uses
# compile-time constants t_j*inv so each term is one mul + one add per operand.
# Returns a list of G+k arrays with x's shape (window index == pykan coef index).
# ----------------------------------------------------------------------------
def _bspline_windows(x, G, k):
    h = 2.0 / G
    t = [-1.0 - k * h + j * h for j in range(G + 2 * k + 1)]
    cmp = [(x >= t[j]).astype(x.dtype) for j in range(G + 2 * k + 1)]
    B = [cmp[j] - cmp[j + 1] for j in range(G + 2 * k)]
    for kk in range(1, k + 1):
        inv = 1.0 / (kk * h)                   # uniform grid: both denominators are kk*h
        xs = x * inv
        B = [(xs - t[j] * inv) * B[j] + (t[j + kk + 1] * inv - xs) * B[j + 1]
             for j in range(len(B) - 1)]
    return B                                   # len == G + k


# ----------------------------------------------------------------------------
# Pallas kernel: one batch tile per grid step, batch on the lane axis.
#   x_ref  : (B_TILE, d_model)       untransposed input block (transposed in-kernel on XLU)
#   w1_ref : (1+G+k, C, 1)           folded encoder x-column weights (output taps pre-summed)
#   kc_ref : (C, 1)                  batch-invariant classifier + d_model*bias1 contribution
#   w2_ref : (1+G+k, C, C, 1)        folded activation-layer weights [feature, out, in, 1]
#   b2_ref : (C, 1)                  activation-layer bias
#   out_ref: (C, B_TILE)             logits, transposed (lane-dense output block)
# ----------------------------------------------------------------------------
def _class_vec_kernel(x_ref, w1_ref, kc_ref, w2_ref, b2_ref, out_ref, *, G, k, C):
    ncoef = G + k

    # (B_TILE, d_model) -> (d_model, B_TILE): batch on lanes; XLU is idle in this kernel.
    xT = x_ref[...].T

    # ---- encoder KANLayer [C+1 -> C+1]: only the x column is data-dependent; the
    #      classifier columns are folded into kc_ref by the wrapper. ----
    silu_x = xT * jax.nn.sigmoid(xT)
    basis_x = _bspline_windows(xT, G, k)                    # ncoef arrays (d_model, B)

    # logits fed to the activation KAN, transposed:
    #   lt[c,b] = sum_j w1f[c,j] * (sum_d feat_j(x[d,b])) + kc[c]
    lt = w1_ref[0] * jnp.sum(silu_x, axis=0, keepdims=True) + kc_ref[...]
    for j in range(ncoef):
        lt = lt + w1_ref[j + 1] * jnp.sum(basis_x[j], axis=0, keepdims=True)
    # lt: (C, B)

    # ---- activation KANLayer [C -> C]: per-output unrolled FMA over (C,B) slabs
    #      (no 3D intermediates, no feature concatenation), one sublane reduce per row. ----
    silu_l = lt * jax.nn.sigmoid(lt)
    basis_l = _bspline_windows(lt, G, k)                    # ncoef arrays (C, B)
    rows = []
    for o in range(C):
        acc = w2_ref[0, o] * silu_l                          # (C,1) * (C,B)
        for j in range(ncoef):
            acc = acc + w2_ref[j + 1, o] * basis_l[j]
        rows.append(jnp.sum(acc, axis=0, keepdims=True))     # (1, B)
    out_ref[...] = jnp.concatenate(rows, axis=0) + b2_ref[...]


# ----------------------------------------------------------------------------
# Wrapper: fold per-edge parameters, hoist the batch-invariant classifier term,
# batch-tile, and call the kernel.
# ----------------------------------------------------------------------------
def _round_up(x, m):
    return (x + m - 1) // m * m


def _fold_params(params, C, d_model, G, k):
    ncoef = G + k
    in1 = out1 = C + 1
    in2 = out2 = C

    # --- encoder (edge index s = o*in1 + i) ---
    sb1 = params["sb1"].reshape(out1, in1)
    sp1 = params["sp1"].reshape(out1, in1)
    m1 = params["m1"].reshape(out1, in1)
    c1 = params["c1"].reshape(out1, in1, ncoef)
    # x input column (i = 0): fold mask*scale_{base,sp}*coef, then pre-sum the two output
    # taps (x-vector + class-vector o=1+c) so the kernel produces lt directly.
    w1_full = jnp.concatenate(
        [(m1[:, 0] * sb1[:, 0])[:, None],
         (m1[:, 0] * sp1[:, 0])[:, None] * c1[:, 0, :]], axis=1)       # (C+1, 1+ncoef)
    w1f = w1_full[0:1, :] + w1_full[1:, :]                             # (C, 1+ncoef)
    w1 = jnp.transpose(w1f)[:, :, None]                                # (1+ncoef, C, 1)

    # classifier columns (i = 1..C): identical for every sample -> constant offset
    cls = params["classifier"].astype(jnp.float32)                     # (d_model, C)
    silu_c = cls * jax.nn.sigmoid(cls)
    basis_c = jnp.stack(_bspline_windows(cls, G, k), axis=-1)          # (d_model, C, ncoef)
    wb = m1[:, 1:] * sb1[:, 1:]                                        # (C+1, C)
    ws = (m1[:, 1:] * sp1[:, 1:])[:, :, None] * c1[:, 1:, :]           # (C+1, C, ncoef)
    kvec = ((wb[:, None, :] * silu_c[None, :, :]).sum(axis=(1, 2))
            + (ws[:, None, :, :] * basis_c[None, :, :, :]).sum(axis=(1, 2, 3))
            + d_model * params["b1"][0])                               # (C+1,)
    kc = (kvec[0] + kvec[1:])[:, None]                                 # (C, 1)

    # --- activation layer: weights stacked per feature -> (1+ncoef, out, in, 1) ---
    sb2 = params["sb2"].reshape(out2, in2)
    sp2 = params["sp2"].reshape(out2, in2)
    m2 = params["m2"].reshape(out2, in2)
    c2 = params["c2"].reshape(out2, in2, ncoef)
    w2b = m2 * sb2                                                     # (C, C)
    w2s = (m2 * sp2)[:, :, None] * c2                                  # (C, C, ncoef)
    w2 = jnp.concatenate([w2b[None], jnp.transpose(w2s, (2, 0, 1))],
                         axis=0)[..., None]                            # (1+ncoef, C, C, 1)
    b2 = params["b2"][0][:, None]                                      # (C, 1)
    return (w1.astype(jnp.float32), kc.astype(jnp.float32),
            w2.astype(jnp.float32), b2.astype(jnp.float32))


@functools.partial(jax.jit, static_argnames=("n_classes", "G", "k"))
def class_vec_forward(x, params, *, n_classes, G, k):
    bs, d_model = x.shape
    C = n_classes
    w1, kc, w2, b2 = _fold_params(params, C, d_model, G, k)

    # Batch tiling: lane-dense tiles, floored at 128 lanes, up to 1024 lanes per step.
    # For bs > 128 keep the grid at >=2 steps so v7x can shard the parallel axis across
    # both TensorCores (near-neutral on 1-TC v5e/v6e).
    if bs <= 128:
        b_tile = 128
    else:
        b_tile = min(1024, _round_up((bs + 1) // 2, 128))
    bs_pad = _round_up(bs, b_tile)

    xf = x.astype(jnp.float32)
    if bs_pad != bs:
        xf = jnp.pad(xf, ((0, bs_pad - bs), (0, 0)))

    def const_spec(a):
        n = a.ndim
        return pl.BlockSpec(a.shape, lambda i, n=n: (0,) * n)

    kernel = functools.partial(_class_vec_kernel, G=G, k=k, C=C)
    out_t = pl.pallas_call(
        kernel,
        out_shape=jax.ShapeDtypeStruct((C, bs_pad), jnp.float32),
        grid=(bs_pad // b_tile,),
        in_specs=[pl.BlockSpec((b_tile, d_model), lambda i: (i, 0)),
                  const_spec(w1), const_spec(kc), const_spec(w2), const_spec(b2)],
        out_specs=pl.BlockSpec((C, b_tile), lambda i: (0, i)),
        compiler_params=pltpu.CompilerParams(
            dimension_semantics=("parallel",),
            # live set at b_tile=1024 is only a few MiB; 48 MiB stays inside v7x's
            # 64 MiB physical VMEM while leaving headroom on v5e/v6e (128 MiB).
            vmem_limit_bytes=48 * 1024 * 1024),
    )(xf, w1, kc, w2, b2)
    return out_t.T[:bs]                                                # (bs, C)


# ----------------------------------------------------------------------------
# Pure-JAX reference: straight per-edge pykan KANLayer form (independent of the
# folded/hoisted kernel math), used only for validation.
# ----------------------------------------------------------------------------
def _extend_grid(grid, k):
    h = (grid[:, -1:] - grid[:, :1]) / (grid.shape[1] - 1)
    for _ in range(k):
        grid = jnp.concatenate([grid[:, :1] - h, grid, grid[:, -1:] + h], axis=1)
    return grid


def _kan_layer_ref(x, grid_ext, coef, scale_base, scale_sp, mask, bias,
                   in_dim, out_dim, k):
    xe = jnp.concatenate([x] * out_dim, axis=1)            # column s = o*in_dim + i
    base = xe * jax.nn.sigmoid(xe)
    xg = xe[:, :, None]
    g = grid_ext[None, :, :]
    B = jnp.logical_and(xg >= g[:, :, :-1], xg < g[:, :, 1:]).astype(x.dtype)
    for kk in range(1, k + 1):
        left = (xg - g[:, :, :-(kk + 1)]) / (g[:, :, kk:-1] - g[:, :, :-(kk + 1)])
        right = (g[:, :, kk + 1:] - xg) / (g[:, :, kk + 1:] - g[:, :, 1:-kk])
        B = left * B[:, :, :-1] + right * B[:, :, 1:]
    y = mask * (scale_base * base + scale_sp * jnp.sum(coef[None] * B, axis=-1))
    y = y.reshape(x.shape[0], out_dim, in_dim).sum(axis=-1)     # sum over inputs per edge
    return y + bias


def class_vec_reference(x, params, *, n_classes, G, k):
    bs, d_model = x.shape
    C = n_classes
    in1 = C + 1
    cls = params["classifier"]
    xc = jnp.concatenate(
        [x[:, :, None], jnp.broadcast_to(cls[None], (bs, d_model, C))],
        axis=-1).reshape(bs * d_model, in1).astype(jnp.float32)
    h = _kan_layer_ref(xc, params["g1"], params["c1"], params["sb1"],
                       params["sp1"], params["m1"], params["b1"], in1, in1, k)
    h = h.reshape(bs, d_model, in1)
    logits = (h[:, :, 0:1] + h[:, :, 1:]).sum(axis=1)            # (bs, C)
    return _kan_layer_ref(logits, params["g2"], params["c2"], params["sb2"],
                          params["sp2"], params["m2"], params["b2"], C, C, k)


def init_params(key, n_classes, d_model, G, k):
    C = n_classes
    in1 = out1 = C + 1
    in2 = out2 = C
    size1, size2 = in1 * out1, in2 * out2
    ncoef = G + k
    ks = jax.random.split(key, 5)

    base_grid = jnp.linspace(-1.0, 1.0, G + 1, dtype=jnp.float32)   # grid_range=[-1,1]
    return dict(
        g1=_extend_grid(jnp.tile(base_grid[None, :], (size1, 1)), k),
        c1=0.1 * jax.random.normal(ks[0], (size1, ncoef), jnp.float32),
        sb1=(1.0 / math.sqrt(in1)
             + 0.1 * jax.random.normal(ks[1], (1, size1), jnp.float32)),
        sp1=jnp.ones((1, size1), jnp.float32),
        m1=jnp.ones((1, size1), jnp.float32),
        b1=jnp.zeros((1, out1), jnp.float32),                       # bias_trainable=False
        g2=_extend_grid(jnp.tile(base_grid[None, :], (size2, 1)), k),
        c2=0.1 * jax.random.normal(ks[2], (size2, ncoef), jnp.float32),
        sb2=(1.0 / math.sqrt(in2)
             + 0.1 * jax.random.normal(ks[3], (1, size2), jnp.float32)),
        sp2=jnp.ones((1, size2), jnp.float32),
        m2=jnp.ones((1, size2), jnp.float32),
        b2=jnp.zeros((1, out2), jnp.float32),
        # the module inits classifier to zeros when w_path is None; use small
        # deterministic values so every spline column is exercised.
        classifier=0.1 * jax.random.normal(ks[4], (d_model, C), jnp.float32),
    )


if __name__ == "__main__":
    n_classes, d_model = 4, 32
    G, k = 5, 3                                     # KAN grid size and spline order

    key = jax.random.PRNGKey(0)
    k_param, k_x1, k_x2, k_b1, k_b2 = jax.random.split(key, 5)
    params = init_params(k_param, n_classes, d_model, G, k)

    def check(x, p):
        out = class_vec_forward(x, p, n_classes=n_classes, G=G, k=k)
        jax.block_until_ready(out)
        ref = class_vec_reference(x, p, n_classes=n_classes, G=G, k=k)
        np.testing.assert_allclose(np.asarray(out), np.asarray(ref),
                                   rtol=1e-4, atol=1e-4)
        return out

    # tiny batch: exercises the padded, single 128-lane tile path
    x_small = jax.random.normal(k_x1, (2, d_model), jnp.float32)
    out_small = check(x_small, params)
    assert out_small.shape == (2, n_classes)

    # multi-step grid path: 2 tiles of 128 lanes (feeds both v7x TensorCores)
    x_big = jax.random.normal(k_x2, (256, d_model), jnp.float32)
    out_big = check(x_big, params)
    assert out_big.shape == (256, n_classes)

    # down-scaled encoder so the intermediate logits land inside the spline grid
    # [-1, 1]; this exercises the activation layer's spline path as well.
    params_s = dict(params)
    params_s["c1"] = params["c1"] * 0.02
    params_s["sb1"] = params["sb1"] * 0.02
    check(x_big, params_s)

    # non-zero per-layer biases: numerically exercises the d_model*b1 constant fold
    # and the b2 add (the default pykan init keeps both at zero).
    params_b = dict(params_s)
    params_b["b1"] = 0.05 * jax.random.normal(k_b1, params["b1"].shape, jnp.float32)
    params_b["b2"] = 0.05 * jax.random.normal(k_b2, params["b2"].shape, jnp.float32)
    check(x_big, params_b)

    print("KERNEL_OK")
</pallas_src>

<mosaic_0001>
module attributes {stable_mosaic.version = 11 : i64} {
  func.func @_class_vec_kernel(%arg0: i32, %arg1: memref<128x32xf32, #tpu.memory_space<vmem>>, %arg2: memref<9x4x1xf32, #tpu.memory_space<vmem>>, %arg3: memref<4x1xf32, #tpu.memory_space<vmem>>, %arg4: memref<9x4x4x1xf32, #tpu.memory_space<vmem>>, %arg5: memref<4x1xf32, #tpu.memory_space<vmem>>, %arg6: memref<4x128xf32, #tpu.memory_space<vmem>>) attributes {dimension_semantics = [#tpu.dimension_semantics<parallel>], iteration_bounds = array<i64: 1>, scalar_prefetch = 0 : i64, scratch_operands = 0 : i64, tpu.core_type = #tpu.core_type<tc>, window_params = [{transform_indices = @transform_0, window_bounds = array<i64: 128, 32>}, {pipeline_mode = #tpu.pipeline_mode<synchronous>, transform_indices = @transform_1, window_bounds = array<i64: 9, 4, 1>}, {pipeline_mode = #tpu.pipeline_mode<synchronous>, transform_indices = @transform_2, window_bounds = array<i64: 4, 1>}, {pipeline_mode = #tpu.pipeline_mode<synchronous>, transform_indices = @transform_3, window_bounds = array<i64: 9, 4, 4, 1>}, {pipeline_mode = #tpu.pipeline_mode<synchronous>, transform_indices = @transform_4, window_bounds = array<i64: 4, 1>}, {transform_indices = @transform_5, window_bounds = array<i64: 4, 128>}]} {
    %c0 = arith.constant 0 : index
    %c0_0 = arith.constant 0 : index
    %0 = vector.load %arg1[%c0, %c0_0] : memref<128x32xf32, #tpu.memory_space<vmem>>, vector<128x32xf32>
    %1 = tpu.transpose %0, [1, 0] : vector<128x32xf32> -> vector<32x128xf32>
    %2 = arith.negf %1 : vector<32x128xf32>
    %3 = math.exp %2 : vector<32x128xf32>
    %cst = arith.constant 1.000000e+00 : f32
    %4 = vector.broadcast %cst : f32 to vector<32x128xf32>
    %5 = arith.addf %4, %3 : vector<32x128xf32>
    %6 = arith.divf %4, %5 : vector<32x128xf32>
    %7 = arith.mulf %1, %6 : vector<32x128xf32>
    %cst_1 = arith.constant -2.200000e+00 : f32
    %8 = vector.broadcast %cst_1 : f32 to vector<32x128xf32>
    %9 = arith.cmpf oge, %1, %8 : vector<32x128xf32>
    %10 = arith.extui %9 : vector<32x128xi1> to vector<32x128xi32>
    %11 = arith.sitofp %10 : vector<32x128xi32> to vector<32x128xf32>
    %cst_2 = arith.constant -1.800000e+00 : f32
    %12 = vector.broadcast %cst_2 : f32 to vector<32x128xf32>
    %13 = arith.cmpf oge, %1, %12 : vector<32x128xf32>
    %14 = arith.extui %13 : vector<32x128xi1> to vector<32x128xi32>
    %15 = arith.sitofp %14 : vector<32x128xi32> to vector<32x128xf32>
    %cst_3 = arith.constant -1.400000e+00 : f32
    %16 = vector.broadcast %cst_3 : f32 to vector<32x128xf32>
    %17 = arith.cmpf oge, %1, %16 : vector<32x128xf32>
    %18 = arith.extui %17 : vector<32x128xi1> to vector<32x128xi32>
    %19 = arith.sitofp %18 : vector<32x128xi32> to vector<32x128xf32>
    %cst_4 = arith.constant -1.000000e+00 : f32
    %20 = vector.broadcast %cst_4 : f32 to vector<32x128xf32>
    %21 = arith.cmpf oge, %1, %20 : vector<32x128xf32>
    %22 = arith.extui %21 : vector<32x128xi1> to vector<32x128xi32>
    %23 = arith.sitofp %22 : vector<32x128xi32> to vector<32x128xf32>
    %cst_5 = arith.constant -6.000000e-01 : f32
    %24 = vector.broadcast %cst_5 : f32 to vector<32x128xf32>
    %25 = arith.cmpf oge, %1, %24 : vector<32x128xf32>
    %26 = arith.extui %25 : vector<32x128xi1> to vector<32x128xi32>
    %27 = arith.sitofp %26 : vector<32x128xi32> to vector<32x128xf32>
    %cst_6 = arith.constant -2.000000e-01 : f32
    %28 = vector.broadcast %cst_6 : f32 to vector<32x128xf32>
    %29 = arith.cmpf oge, %1, %28 : vector<32x128xf32>
    %30 = arith.extui %29 : vector<32x128xi1> to vector<32x128xi32>
    %31 = arith.sitofp %30 : vector<32x128xi32> to vector<32x128xf32>
    %cst_7 = arith.constant 2.000000e-01 : f32
    %32 = vector.broadcast %cst_7 : f32 to vector<32x128xf32>
    %33 = arith.cmpf oge, %1, %32 : vector<32x128xf32>
    %34 = arith.extui %33 : vector<32x128xi1> to vector<32x128xi32>
    %35 = arith.sitofp %34 : vector<32x128xi32> to vector<32x128xf32>
    %cst_8 = arith.constant 6.000000e-01 : f32
    %36 = vector.broadcast %cst_8 : f32 to vector<32x128xf32>
    %37 = arith.cmpf oge, %1, %36 : vector<32x128xf32>
    %38 = arith.extui %37 : vector<32x128xi1> to vector<32x128xi32>
    %39 = arith.sitofp %38 : vector<32x128xi32> to vector<32x128xf32>
    %cst_9 = arith.constant 1.000000e+00 : f32
    %40 = vector.broadcast %cst_9 : f32 to vector<32x128xf32>
    %41 = arith.cmpf oge, %1, %40 : vector<32x128xf32>
    %42 = arith.extui %41 : vector<32x128xi1> to vector<32x128xi32>
    %43 = arith.sitofp %42 : vector<32x128xi32> to vector<32x128xf32>
    %cst_10 = arith.constant 1.400000e+00 : f32
    %44 = vector.broadcast %cst_10 : f32 to vector<32x128xf32>
    %45 = arith.cmpf oge, %1, %44 : vector<32x128xf32>
    %46 = arith.extui %45 : vector<32x128xi1> to vector<32x128xi32>
    %47 = arith.sitofp %46 : vector<32x128xi32> to vector<32x128xf32>
    %cst_11 = arith.constant 1.800000e+00 : f32
    %48 = vector.broadcast %cst_11 : f32 to vector<32x128xf32>
    %49 = arith.cmpf oge, %1, %48 : vector<32x128xf32>
    %50 = arith.extui %49 : vector<32x128xi1> to vector<32x128xi32>
    %51 = arith.sitofp %50 : vector<32x128xi32> to vector<32x128xf32>
    %cst_12 = arith.constant 2.200000e+00 : f32
    %52 = vector.broadcast %cst_12 : f32 to vector<32x128xf32>
    %53 = arith.cmpf oge, %1, %52 : vector<32x128xf32>
    %54 = arith.extui %53 : vector<32x128xi1> to vector<32x128xi32>
    %55 = arith.sitofp %54 : vector<32x128xi32> to vector<32x128xf32>
    %56 = arith.subf %11, %15 : vector<32x128xf32>
    %57 = arith.subf %15, %19 : vector<32x128xf32>
    %58 = arith.subf %19, %23 : vector<32x128xf32>
    %59 = arith.subf %23, %27 : vector<32x128xf32>
    %60 = arith.subf %27, %31 : vector<32x128xf32>
    %61 = arith.subf %31, %35 : vector<32x128xf32>
    %62 = arith.subf %35, %39 : vector<32x128xf32>
    %63 = arith.subf %39, %43 : vector<32x128xf32>
    %64 = arith.subf %43, %47 : vector<32x128xf32>
    %65 = arith.subf %47, %51 : vector<32x128xf32>
    %66 = arith.subf %51, %55 : vector<32x128xf32>
    %cst_13 = arith.constant 2.500000e+00 : f32
    %67 = vector.broadcast %cst_13 : f32 to vector<32x128xf32>
    %68 = arith.mulf %1, %67 : vector<32x128xf32>
    %cst_14 = arith.constant -5.500000e+00 : f32
    %69 = vector.broadcast %cst_14 : f32 to vector<32x128xf32>
    %70 = arith.subf %68, %69 : vector<32x128xf32>
    %71 = arith.mulf %70, %56 : vector<32x128xf32>
    %cst_15 = arith.constant -3.500000e+00 : f32
    %72 = vector.broadcast %cst_15 : f32 to vector<32x128xf32>
    %73 = arith.subf %72, %68 : vector<32x128xf32>
    %74 = arith.mulf %73, %57 : vector<32x128xf32>
    %75 = arith.addf %71, %74 : vector<32x128xf32>
    %cst_16 = arith.constant -4.500000e+00 : f32
    %76 = vector.broadcast %cst_16 : f32 to vector<32x128xf32>
    %77 = arith.subf %68, %76 : vector<32x128xf32>
    %78 = arith.mulf %77, %57 : vector<32x128xf32>
    %cst_17 = arith.constant -2.500000e+00 : f32
    %79 = vector.broadcast %cst_17 : f32 to vector<32x128xf32>
    %80 = arith.subf %79, %68 : vector<32x128xf32>
    %81 = arith.mulf %80, %58 : vector<32x128xf32>
    %82 = arith.addf %78, %81 : vector<32x128xf32>
    %cst_18 = arith.constant -3.500000e+00 : f32
    %83 = vector.broadcast %cst_18 : f32 to vector<32x128xf32>
    %84 = arith.subf %68, %83 : vector<32x128xf32>
    %85 = arith.mulf %84, %58 : vector<32x128xf32>
    %cst_19 = arith.constant -1.500000e+00 : f32
    %86 = vector.broadcast %cst_19 : f32 to vector<32x128xf32>
    %87 = arith.subf %86, %68 : vector<32x128xf32>
    %88 = arith.mulf %87, %59 : vector<32x128xf32>
    %89 = arith.addf %85, %88 : vector<32x128xf32>
    %cst_20 = arith.constant -2.500000e+00 : f32
    %90 = vector.broadcast %cst_20 : f32 to vector<32x128xf32>
    %91 = arith.subf %68, %90 : vector<32x128xf32>
    %92 = arith.mulf %91, %59 : vector<32x128xf32>
    %cst_21 = arith.constant -5.000000e-01 : f32
    %93 = vector.broadcast %cst_21 : f32 to vector<32x128xf32>
    %94 = arith.subf %93, %68 : vector<32x128xf32>
    %95 = arith.mulf %94, %60 : vector<32x128xf32>
    %96 = arith.addf %92, %95 : vector<32x128xf32>
    %cst_22 = arith.constant -1.500000e+00 : f32
    %97 = vector.broadcast %cst_22 : f32 to vector<32x128xf32>
    %98 = arith.subf %68, %97 : vector<32x128xf32>
    %99 = arith.mulf %98, %60 : vector<32x128xf32>
    %cst_23 = arith.constant 5.000000e-01 : f32
    %100 = vector.broadcast %cst_23 : f32 to vector<32x128xf32>
    %101 = arith.subf %100, %68 : vector<32x128xf32>
    %102 = arith.mulf %101, %61 : vector<32x128xf32>
    %103 = arith.addf %99, %102 : vector<32x128xf32>
    %cst_24 = arith.constant -5.000000e-01 : f32
    %104 = vector.broadcast %cst_24 : f32 to vector<32x128xf32>
    %105 = arith.subf %68, %104 : vector<32x128xf32>
    %106 = arith.mulf %105, %61 : vector<32x128xf32>
    %cst_25 = arith.constant 1.500000e+00 : f32
    %107 = vector.broadcast %cst_25 : f32 to vector<32x128xf32>
    %108 = arith.subf %107, %68 : vector<32x128xf32>
    %109 = arith.mulf %108, %62 : vector<32x128xf32>
    %110 = arith.addf %106, %109 : vector<32x128xf32>
    %cst_26 = arith.constant 5.000000e-01 : f32
    %111 = vector.broadcast %cst_26 : f32 to vector<32x128xf32>
    %112 = arith.subf %68, %111 : vector<32x128xf32>
    %113 = arith.mulf %112, %62 : vector<32x128xf32>
    %cst_27 = arith.constant 2.500000e+00 : f32
    %114 = vector.broadcast %cst_27 : f32 to vector<32x128xf32>
    %115 = arith.subf %114, %68 : vector<32x128xf32>
    %116 = arith.mulf %115, %63 : vector<32x128xf32>
    %117 = arith.addf %113, %116 : vector<32x128xf32>
    %cst_28 = arith.constant 1.500000e+00 : f32
    %118 = vector.broadcast %cst_28 : f32 to vector<32x128xf32>
    %119 = arith.subf %68, %118 : vector<32x128xf32>
    %120 = arith.mulf %119, %63 : vector<32x128xf32>
    %cst_29 = arith.constant 3.500000e+00 : f32
    %121 = vector.broadcast %cst_29 : f32 to vector<32x128xf32>
    %122 = arith.subf %121, %68 : vector<32x128xf32>
    %123 = arith.mulf %122, %64 : vector<32x128xf32>
    %124 = arith.addf %120, %123 : vector<32x128xf32>
    %cst_30 = arith.constant 2.500000e+00 : f32
    %125 = vector.broadcast %cst_30 : f32 to vector<32x128xf32>
    %126 = arith.subf %68, %125 : vector<32x128xf32>
    %127 = arith.mulf %126, %64 : vector<32x128xf32>
    %cst_31 = arith.constant 4.500000e+00 : f32
    %128 = vector.broadcast %cst_31 : f32 to vector<32x128xf32>
    %129 = arith.subf %128, %68 : vector<32x128xf32>
    %130 = arith.mulf %129, %65 : vector<32x128xf32>
    %131 = arith.addf %127, %130 : vector<32x128xf32>
    %cst_32 = arith.constant 3.500000e+00 : f32
    %132 = vector.broadcast %cst_32 : f32 to vector<32x128xf32>
    %133 = arith.subf %68, %132 : vector<32x128xf32>
    %134 = arith.mulf %133, %65 : vector<32x128xf32>
    %cst_33 = arith.constant 5.500000e+00 : f32
    %135 = vector.broadcast %cst_33 : f32 to vector<32x128xf32>
    %136 = arith.subf %135, %68 : vector<32x128xf32>
    %137 = arith.mulf %136, %66 : vector<32x128xf32>
    %138 = arith.addf %134, %137 : vector<32x128xf32>
    %cst_34 = arith.constant 1.250000e+00 : f32
    %139 = vector.broadcast %cst_34 : f32 to vector<32x128xf32>
    %140 = arith.mulf %1, %139 : vector<32x128xf32>
    %cst_35 = arith.constant -2.750000e+00 : f32
    %141 = vector.broadcast %cst_35 : f32 to vector<32x128xf32>
    %142 = arith.subf %140, %141 : vector<32x128xf32>
    %143 = arith.mulf %142, %75 : vector<32x128xf32>
    %cst_36 = arith.constant -1.250000e+00 : f32
    %144 = vector.broadcast %cst_36 : f32 to vector<32x128xf32>
    %145 = arith.subf %144, %140 : vector<32x128xf32>
    %146 = arith.mulf %145, %82 : vector<32x128xf32>
    %147 = arith.addf %143, %146 : vector<32x128xf32>
    %cst_37 = arith.constant -2.250000e+00 : f32
    %148 = vector.broadcast %cst_37 : f32 to vector<32x128xf32>
    %149 = arith.subf %140, %148 : vector<32x128xf32>
    %150 = arith.mulf %149, %82 : vector<32x128xf32>
    %cst_38 = arith.constant -7.500000e-01 : f32
    %151 = vector.broadcast %cst_38 : f32 to vector<32x128xf32>
    %152 = arith.subf %151, %140 : vector<32x128xf32>
    %153 = arith.mulf %152, %89 : vector<32x128xf32>
    %154 = arith.addf %150, %153 : vector<32x128xf32>
    %cst_39 = arith.constant -1.750000e+00 : f32
    %155 = vector.broadcast %cst_39 : f32 to vector<32x128xf32>
    %156 = arith.subf %140, %155 : vector<32x128xf32>
    %157 = arith.mulf %156, %89 : vector<32x128xf32>
    %cst_40 = arith.constant -2.500000e-01 : f32
    %158 = vector.broadcast %cst_40 : f32 to vector<32x128xf32>
    %159 = arith.subf %158, %140 : vector<32x128xf32>
    %160 = arith.mulf %159, %96 : vector<32x128xf32>
    %161 = arith.addf %157, %160 : vector<32x128xf32>
    %cst_41 = arith.constant -1.250000e+00 : f32
    %162 = vector.broadcast %cst_41 : f32 to vector<32x128xf32>
    %163 = arith.subf %140, %162 : vector<32x128xf32>
    %164 = arith.mulf %163, %96 : vector<32x128xf32>
    %cst_42 = arith.constant 2.500000e-01 : f32
    %165 = vector.broadcast %cst_42 : f32 to vector<32x128xf32>
    %166 = arith.subf %165, %140 : vector<32x128xf32>
    %167 = arith.mulf %166, %103 : vector<32x128xf32>
    %168 = arith.addf %164, %167 : vector<32x128xf32>
    %cst_43 = arith.constant -7.500000e-01 : f32
    %169 = vector.broadcast %cst_43 : f32 to vector<32x128xf32>
    %170 = arith.subf %140, %169 : vector<32x128xf32>
    %171 = arith.mulf %170, %103 : vector<32x128xf32>
    %cst_44 = arith.constant 7.500000e-01 : f32
    %172 = vector.broadcast %cst_44 : f32 to vector<32x128xf32>
    %173 = arith.subf %172, %140 : vector<32x128xf32>
    %174 = arith.mulf %173, %110 : vector<32x128xf32>
    %175 = arith.addf %171, %174 : vector<32x128xf32>
    %cst_45 = arith.constant -2.500000e-01 : f32
    %176 = vector.broadcast %cst_45 : f32 to vector<32x128xf32>
    %177 = arith.subf %140, %176 : vector<32x128xf32>
    %178 = arith.mulf %177, %110 : vector<32x128xf32>
    %cst_46 = arith.constant 1.250000e+00 : f32
    %179 = vector.broadcast %cst_46 : f32 to vector<32x128xf32>
    %180 = arith.subf %179, %140 : vector<32x128xf32>
    %181 = arith.mulf %180, %117 : vector<32x128xf32>
    %182 = arith.addf %178, %181 : vector<32x128xf32>
    %cst_47 = arith.constant 2.500000e-01 : f32
    %183 = vector.broadcast %cst_47 : f32 to vector<32x128xf32>
    %184 = arith.subf %140, %183 : vector<32x128xf32>
    %185 = arith.mulf %184, %117 : vector<32x128xf32>
    %cst_48 = arith.constant 1.750000e+00 : f32
    %186 = vector.broadcast %cst_48 : f32 to vector<32x128xf32>
    %187 = arith.subf %186, %140 : vector<32x128xf32>
    %188 = arith.mulf %187, %124 : vector<32x128xf32>
    %189 = arith.addf %185, %188 : vector<32x128xf32>
    %cst_49 = arith.constant 7.500000e-01 : f32
    %190 = vector.broadcast %cst_49 : f32 to vector<32x128xf32>
    %191 = arith.subf %140, %190 : vector<32x128xf32>
    %192 = arith.mulf %191, %124 : vector<32x128xf32>
    %cst_50 = arith.constant 2.250000e+00 : f32
    %193 = vector.broadcast %cst_50 : f32 to vector<32x128xf32>
    %194 = arith.subf %193, %140 : vector<32x128xf32>
    %195 = arith.mulf %194, %131 : vector<32x128xf32>
    %196 = arith.addf %192, %195 : vector<32x128xf32>
    %cst_51 = arith.constant 1.250000e+00 : f32
    %197 = vector.broadcast %cst_51 : f32 to vector<32x128xf32>
    %198 = arith.subf %140, %197 : vector<32x128xf32>
    %199 = arith.mulf %198, %131 : vector<32x128xf32>
    %cst_52 = arith.constant 2.750000e+00 : f32
    %200 = vector.broadcast %cst_52 : f32 to vector<32x128xf32>
    %201 = arith.subf %200, %140 : vector<32x128xf32>
    %202 = arith.mulf %201, %138 : vector<32x128xf32>
    %203 = arith.addf %199, %202 : vector<32x128xf32>
    %cst_53 = arith.constant 0.833333313 : f32
    %204 = vector.broadcast %cst_53 : f32 to vector<32x128xf32>
    %205 = arith.mulf %1, %204 : vector<32x128xf32>
    %cst_54 = arith.constant -1.83333337 : f32
    %206 = vector.broadcast %cst_54 : f32 to vector<32x128xf32>
    %207 = arith.subf %205, %206 : vector<32x128xf32>
    %208 = arith.mulf %207, %147 : vector<32x128xf32>
    %cst_55 = arith.constant -5.000000e-01 : f32
    %209 = vector.broadcast %cst_55 : f32 to vector<32x128xf32>
    %210 = arith.subf %209, %205 : vector<32x128xf32>
    %211 = arith.mulf %210, %154 : vector<32x128xf32>
    %212 = arith.addf %208, %211 : vector<32x128xf32>
    %cst_56 = arith.constant -1.500000e+00 : f32
    %213 = vector.broadcast %cst_56 : f32 to vector<32x128xf32>
    %214 = arith.subf %205, %213 : vector<32x128xf32>
    %215 = arith.mulf %214, %154 : vector<32x128xf32>
    %cst_57 = arith.constant -0.166666672 : f32
    %216 = vector.broadcast %cst_57 : f32 to vector<32x128xf32>
    %217 = arith.subf %216, %205 : vector<32x128xf32>
    %218 = arith.mulf %217, %161 : vector<32x128xf32>
    %219 = arith.addf %215, %218 : vector<32x128xf32>
    %cst_58 = arith.constant -1.16666663 : f32
    %220 = vector.broadcast %cst_58 : f32 to vector<32x128xf32>
    %221 = arith.subf %205, %220 : vector<32x128xf32>
    %222 = arith.mulf %221, %161 : vector<32x128xf32>
    %cst_59 = arith.constant 0.166666672 : f32
    %223 = vector.broadcast %cst_59 : f32 to vector<32x128xf32>
    %224 = arith.subf %223, %205 : vector<32x128xf32>
    %225 = arith.mulf %224, %168 : vector<32x128xf32>
    %226 = arith.addf %222, %225 : vector<32x128xf32>
    %cst_60 = arith.constant -0.833333313 : f32
    %227 = vector.broadcast %cst_60 : f32 to vector<32x128xf32>
    %228 = arith.subf %205, %227 : vector<32x128xf32>
    %229 = arith.mulf %228, %168 : vector<32x128xf32>
    %cst_61 = arith.constant 5.000000e-01 : f32
    %230 = vector.broadcast %cst_61 : f32 to vector<32x128xf32>
    %231 = arith.subf %230, %205 : vector<32x128xf32>
    %232 = arith.mulf %231, %175 : vector<32x128xf32>
    %233 = arith.addf %229, %232 : vector<32x128xf32>
    %cst_62 = arith.constant -5.000000e-01 : f32
    %234 = vector.broadcast %cst_62 : f32 to vector<32x128xf32>
    %235 = arith.subf %205, %234 : vector<32x128xf32>
    %236 = arith.mulf %235, %175 : vector<32x128xf32>
    %cst_63 = arith.constant 0.833333313 : f32
    %237 = vector.broadcast %cst_63 : f32 to vector<32x128xf32>
    %238 = arith.subf %237, %205 : vector<32x128xf32>
    %239 = arith.mulf %238, %182 : vector<32x128xf32>
    %240 = arith.addf %236, %239 : vector<32x128xf32>
    %cst_64 = arith.constant -0.166666672 : f32
    %241 = vector.broadcast %cst_64 : f32 to vector<32x128xf32>
    %242 = arith.subf %205, %241 : vector<32x128xf32>
    %243 = arith.mulf %242, %182 : vector<32x128xf32>
    %cst_65 = arith.constant 1.16666663 : f32
    %244 = vector.broadcast %cst_65 : f32 to vector<32x128xf32>
    %245 = arith.subf %244, %205 : vector<32x128xf32>
    %246 = arith.mulf %245, %189 : vector<32x128xf32>
    %247 = arith.addf %243, %246 : vector<32x128xf32>
    %cst_66 = arith.constant 0.166666672 : f32
    %248 = vector.broadcast %cst_66 : f32 to vector<32x128xf32>
    %249 = arith.subf %205, %248 : vector<32x128xf32>
    %250 = arith.mulf %249, %189 : vector<32x128xf32>
    %cst_67 = arith.constant 1.500000e+00 : f32
    %251 = vector.broadcast %cst_67 : f32 to vector<32x128xf32>
    %252 = arith.subf %251, %205 : vector<32x128xf32>
    %253 = arith.mulf %252, %196 : vector<32x128xf32>
    %254 = arith.addf %250, %253 : vector<32x128xf32>
    %cst_68 = arith.constant 5.000000e-01 : f32
    %255 = vector.broadcast %cst_68 : f32 to vector<32x128xf32>
    %256 = arith.subf %205, %255 : vector<32x128xf32>
    %257 = arith.mulf %256, %196 : vector<32x128xf32>
    %cst_69 = arith.constant 1.83333337 : f32
    %258 = vector.broadcast %cst_69 : f32 to vector<32x128xf32>
    %259 = arith.subf %258, %205 : vector<32x128xf32>
    %260 = arith.mulf %259, %203 : vector<32x128xf32>
    %261 = arith.addf %257, %260 : vector<32x128xf32>
    %c0_70 = arith.constant 0 : index
    %c0_71 = arith.constant 0 : index
    %c0_72 = arith.constant 0 : index
    %262 = vector.load %arg2[%c0_70, %c0_71, %c0_72] : memref<9x4x1xf32, #tpu.memory_space<vmem>>, vector<1x4x1xf32>
    %263 = vector.shape_cast %262 : vector<1x4x1xf32> to vector<4x1xf32>
    %cst_73 = arith.constant dense<0.000000e+00> : vector<128xf32>
    %264 = vector.multi_reduction <add>, %7, %cst_73 [0] : vector<32x128xf32> to vector<128xf32>
    %265 = vector.shape_cast %264 : vector<128xf32> to vector<1x128xf32>
    %266 = vector.broadcast %263 : vector<4x1xf32> to vector<4x128xf32>
    %267 = vector.broadcast %265 : vector<1x128xf32> to vector<4x128xf32>
    %268 = arith.mulf %266, %267 : vector<4x128xf32>
    %c0_74 = arith.constant 0 : index
    %c0_75 = arith.constant 0 : index
    %269 = vector.load %arg3[%c0_74, %c0_75] : memref<4x1xf32, #tpu.memory_space<vmem>>, vector<4x1xf32>
    %270 = vector.broadcast %269 : vector<4x1xf32> to vector<4x128xf32>
    %271 = arith.addf %268, %270 : vector<4x128xf32>
    %c1 = arith.constant 1 : index
    %c0_76 = arith.constant 0 : index
    %c0_77 = arith.constant 0 : index
    %272 = vector.load %arg2[%c1, %c0_76, %c0_77] : memref<9x4x1xf32, #tpu.memory_space<vmem>>, vector<1x4x1xf32>
    %273 = vector.shape_cast %272 : vector<1x4x1xf32> to vector<4x1xf32>
    %cst_78 = arith.constant dense<0.000000e+00> : vector<128xf32>
    %274 = vector.multi_reduction <add>, %212, %cst_78 [0] : vector<32x128xf32> to vector<128xf32>
    %275 = vector.shape_cast %274 : vector<128xf32> to vector<1x128xf32>
    %276 = vector.broadcast %273 : vector<4x1xf32> to vector<4x128xf32>
    %277 = vector.broadcast %275 : vector<1x128xf32> to vector<4x128xf32>
    %278 = arith.mulf %276, %277 : vector<4x128xf32>
    %279 = arith.addf %271, %278 : vector<4x128xf32>
    %c2 = arith.constant 2 : index
    %c0_79 = arith.constant 0 : index
    %c0_80 = arith.constant 0 : index
    %280 = vector.load %arg2[%c2, %c0_79, %c0_80] : memref<9x4x1xf32, #tpu.memory_space<vmem>>, vector<1x4x1xf32>
    %281 = vector.shape_cast %280 : vector<1x4x1xf32> to vector<4x1xf32>
    %cst_81 = arith.constant dense<0.000000e+00> : vector<128xf32>
    %282 = vector.multi_reduction <add>, %219, %cst_81 [0] : vector<32x128xf32> to vector<128xf32>
    %283 = vector.shape_cast %282 : vector<128xf32> to vector<1x128xf32>
    %284 = vector.broadcast %281 : vector<4x1xf32> to vector<4x128xf32>
    %285 = vector.broadcast %283 : vector<1x128xf32> to vector<4x128xf32>
    %286 = arith.mulf %284, %285 : vector<4x128xf32>
    %287 = arith.addf %279, %286 : vector<4x128xf32>
    %c3 = arith.constant 3 : index
    %c0_82 = arith.constant 0 : index
    %c0_83 = arith.constant 0 : index
    %288 = vector.load %arg2[%c3, %c0_82, %c0_83] : memref<9x4x1xf32, #tpu.memory_space<vmem>>, vector<1x4x1xf32>
    %289 = vector.shape_cast %288 : vector<1x4x1xf32> to vector<4x1xf32>
    %cst_84 = arith.constant dense<0.000000e+00> : vector<128xf32>
    %290 = vector.multi_reduction <add>, %226, %cst_84 [0] : vector<32x128xf32> to vector<128xf32>
    %291 = vector.shape_cast %290 : vector<128xf32> to vector<1x128xf32>
    %292 = vector.broadcast %289 : vector<4x1xf32> to vector<4x128xf32>
    %293 = vector.broadcast %291 : vector<1x128xf32> to vector<4x128xf32>
    %294 = arith.mulf %292, %293 : vector<4x128xf32>
    %295 = arith.addf %287, %294 : vector<4x128xf32>
    %c4 = arith.constant 4 : index
    %c0_85 = arith.constant 0 : index
    %c0_86 = arith.constant 0 : index
    %296 = vector.load %arg2[%c4, %c0_85, %c0_86] : memref<9x4x1xf32, #tpu.memory_space<vmem>>, vector<1x4x1xf32>
    %297 = vector.shape_cast %296 : vector<1x4x1xf32> to vector<4x1xf32>
    %cst_87 = arith.constant dense<0.000000e+00> : vector<128xf32>
    %298 = vector.multi_reduction <add>, %233, %cst_87 [0] : vector<32x128xf32> to vector<128xf32>
    %299 = vector.shape_cast %298 : vector<128xf32> to vector<1x128xf32>
    %300 = vector.broadcast %297 : vector<4x1xf32> to vector<4x128xf32>
    %301 = vector.broadcast %299 : vector<1x128xf32> to vector<4x128xf32>
    %302 = arith.mulf %300, %301 : vector<4x128xf32>
    %303 = arith.addf %295, %302 : vector<4x128xf32>
    %c5 = arith.constant 5 : index
    %c0_88 = arith.constant 0 : index
    %c0_89 = arith.constant 0 : index
    %304 = vector.load %arg2[%c5, %c0_88, %c0_89] : memref<9x4x1xf32, #tpu.memory_space<vmem>>, vector<1x4x1xf32>
    %305 = vector.shape_cast %304 : vector<1x4x1xf32> to vector<4x1xf32>
    %cst_90 = arith.constant dense<0.000000e+00> : vector<128xf32>
    %306 = vector.multi_reduction <add>, %240, %cst_90 [0] : vector<32x128xf32> to vector<128xf32>
    %307 = vector.shape_cast %306 : vector<128xf32> to vector<1x128xf32>
    %308 = vector.broadcast %305 : vector<4x1xf32> to vector<4x128xf32>
    %309 = vector.broadcast %307 : vector<1x128xf32> to vector<4x128xf32>
    %310 = arith.mulf %308, %309 : vector<4x128xf32>
    %311 = arith.addf %303, %310 : vector<4x128xf32>
    %c6 = arith.constant 6 : index
    %c0_91 = arith.constant 0 : index
    %c0_92 = arith.constant 0 : index
    %312 = vector.load %arg2[%c6, %c0_91, %c0_92] : memref<9x4x1xf32, #tpu.memory_space<vmem>>, vector<1x4x1xf32>
    %313 = vector.shape_cast %312 : vector<1x4x1xf32> to vector<4x1xf32>
    %cst_93 = arith.constant dense<0.000000e+00> : vector<128xf32>
    %314 = vector.multi_reduction <add>, %247, %cst_93 [0] : vector<32x128xf32> to vector<128xf32>
    %315 = vector.shape_cast %314 : vector<128xf32> to vector<1x128xf32>
    %316 = vector.broadcast %313 : vector<4x1xf32> to vector<4x128xf32>
    %317 = vector.broadcast %315 : vector<1x128xf32> to vector<4x128xf32>
    %318 = arith.mulf %316, %317 : vector<4x128xf32>
    %319 = arith.addf %311, %318 : vector<4x128xf32>
    %c7 = arith.constant 7 : index
    %c0_94 = arith.constant 0 : index
    %c0_95 = arith.constant 0 : index
    %320 = vector.load %arg2[%c7, %c0_94, %c0_95] : memref<9x4x1xf32, #tpu.memory_space<vmem>>, vector<1x4x1xf32>
    %321 = vector.shape_cast %320 : vector<1x4x1xf32> to vector<4x1xf32>
    %cst_96 = arith.constant dense<0.000000e+00> : vector<128xf32>
    %322 = vector.multi_reduction <add>, %254, %cst_96 [0] : vector<32x128xf32> to vector<128xf32>
    %323 = vector.shape_cast %322 : vector<128xf32> to vector<1x128xf32>
    %324 = vector.broadcast %321 : vector<4x1xf32> to vector<4x128xf32>
    %325 = vector.broadcast %323 : vector<1x128xf32> to vector<4x128xf32>
    %326 = arith.mulf %324, %325 : vector<4x128xf32>
    %327 = arith.addf %319, %326 : vector<4x128xf32>
    %c8 = arith.constant 8 : index
    %c0_97 = arith.constant 0 : index
    %c0_98 = arith.constant 0 : index
    %328 = vector.load %arg2[%c8, %c0_97, %c0_98] : memref<9x4x1xf32, #tpu.memory_space<vmem>>, vector<1x4x1xf32>
    %329 = vector.shape_cast %328 : vector<1x4x1xf32> to vector<4x1xf32>
    %cst_99 = arith.constant dense<0.000000e+00> : vector<128xf32>
    %330 = vector.multi_reduction <add>, %261, %cst_99 [0] : vector<32x128xf32> to vector<128xf32>
    %331 = vector.shape_cast %330 : vector<128xf32> to vector<1x128xf32>
    %332 = vector.broadcast %329 : vector<4x1xf32> to vector<4x128xf32>
    %333 = vector.broadcast %331 : vector<1x128xf32> to vector<4x128xf32>
    %334 = arith.mulf %332, %333 : vector<4x128xf32>
    %335 = arith.addf %327, %334 : vector<4x128xf32>
    %336 = arith.negf %335 : vector<4x128xf32>
    %337 = math.exp %336 : vector<4x128xf32>
    %cst_100 = arith.constant 1.000000e+00 : f32
    %338 = vector.broadcast %cst_100 : f32 to vector<4x128xf32>
    %339 = arith.addf %338, %337 : vector<4x128xf32>
    %340 = arith.divf %338, %339 : vector<4x128xf32>
    %341 = arith.mulf %335, %340 : vector<4x128xf32>
    %cst_101 = arith.constant -2.200000e+00 : f32
    %342 = vector.broadcast %cst_101 : f32 to vector<4x128xf32>
    %343 = arith.cmpf oge, %335, %342 : vector<4x128xf32>
    %344 = arith.extui %343 : vector<4x128xi1> to vector<4x128xi32>
    %345 = arith.sitofp %344 : vector<4x128xi32> to vector<4x128xf32>
    %cst_102 = arith.constant -1.800000e+00 : f32
    %346 = vector.broadcast %cst_102 : f32 to vector<4x128xf32>
    %347 = arith.cmpf oge, %335, %346 : vector<4x128xf32>
    %348 = arith.extui %347 : vector<4x128xi1> to vector<4x128xi32>
    %349 = arith.sitofp %348 : vector<4x128xi32> to vector<4x128xf32>
    %cst_103 = arith.constant -1.400000e+00 : f32
    %350 = vector.broadcast %cst_103 : f32 to vector<4x128xf32>
    %351 = arith.cmpf oge, %335, %350 : vector<4x128xf32>
    %352 = arith.extui %351 : vector<4x128xi1> to vector<4x128xi32>
    %353 = arith.sitofp %352 : vector<4x128xi32> to vector<4x128xf32>
    %cst_104 = arith.constant -1.000000e+00 : f32
    %354 = vector.broadcast %cst_104 : f32 to vector<4x128xf32>
    %355 = arith.cmpf oge, %335, %354 : vector<4x128xf32>
    %356 = arith.extui %355 : vector<4x128xi1> to vector<4x128xi32>
    %357 = arith.sitofp %356 : vector<4x128xi32> to vector<4x128xf32>
    %cst_105 = arith.constant -6.000000e-01 : f32
    %358 = vector.broadcast %cst_105 : f32 to vector<4x128xf32>
    %359 = arith.cmpf oge, %335, %358 : vector<4x128xf32>
    %360 = arith.extui %359 : vector<4x128xi1> to vector<4x128xi32>
    %361 = arith.sitofp %360 : vector<4x128xi32> to vector<4x128xf32>
    %cst_106 = arith.constant -2.000000e-01 : f32
    %362 = vector.broadcast %cst_106 : f32 to vector<4x128xf32>
    %363 = arith.cmpf oge, %335, %362 : vector<4x128xf32>
    %364 = arith.extui %363 : vector<4x128xi1> to vector<4x128xi32>
    %365 = arith.sitofp %364 : vector<4x128xi32> to vector<4x128xf32>
    %cst_107 = arith.constant 2.000000e-01 : f32
    %366 = vector.broadcast %cst_107 : f32 to vector<4x128xf32>
    %367 = arith.cmpf oge, %335, %366 : vector<4x128xf32>
    %368 = arith.extui %367 : vector<4x128xi1> to vector<4x128xi32>
    %369 = arith.sitofp %368 : vector<4x128xi32> to vector<4x128xf32>
    %cst_108 = arith.constant 6.000000e-01 : f32
    %370 = vector.broadcast %cst_108 : f32 to vector<4x128xf32>
    %371 = arith.cmpf oge, %335, %370 : vector<4x128xf32>
    %372 = arith.extui %371 : vector<4x128xi1> to vector<4x128xi32>
    %373 = arith.sitofp %372 : vector<4x128xi32> to vector<4x128xf32>
    %cst_109 = arith.constant 1.000000e+00 : f32
    %374 = vector.broadcast %cst_109 : f32 to vector<4x128xf32>
    %375 = arith.cmpf oge, %335, %374 : vector<4x128xf32>
    %376 = arith.extui %375 : vector<4x128xi1> to vector<4x128xi32>
    %377 = arith.sitofp %376 : vector<4x128xi32> to vector<4x128xf32>
    %cst_110 = arith.constant 1.400000e+00 : f32
    %378 = vector.broadcast %cst_110 : f32 to vector<4x128xf32>
    %379 = arith.cmpf oge, %335, %378 : vector<4x128xf32>
    %380 = arith.extui %379 : vector<4x128xi1> to vector<4x128xi32>
    %381 = arith.sitofp %380 : vector<4x128xi32> to vector<4x128xf32>
    %cst_111 = arith.constant 1.800000e+00 : f32
    %382 = vector.broadcast %cst_111 : f32 to vector<4x128xf32>
    %383 = arith.cmpf oge, %335, %382 : vector<4x128xf32>
    %384 = arith.extui %383 : vector<4x128xi1> to vector<4x128xi32>
    %385 = arith.sitofp %384 : vector<4x128xi32> to vector<4x128xf32>
    %cst_112 = arith.constant 2.200000e+00 : f32
    %386 = vector.broadcast %cst_112 : f32 to vector<4x128xf32>
    %387 = arith.cmpf oge, %335, %386 : vector<4x128xf32>
    %388 = arith.extui %387 : vector<4x128xi1> to vector<4x128xi32>
    %389 = arith.sitofp %388 : vector<4x128xi32> to vector<4x128xf32>
    %390 = arith.subf %345, %349 : vector<4x128xf32>
    %391 = arith.subf %349, %353 : vector<4x128xf32>
    %392 = arith.subf %353, %357 : vector<4x128xf32>
    %393 = arith.subf %357, %361 : vector<4x128xf32>
    %394 = arith.subf %361, %365 : vector<4x128xf32>
    %395 = arith.subf %365, %369 : vector<4x128xf32>
    %396 = arith.subf %369, %373 : vector<4x128xf32>
    %397 = arith.subf %373, %377 : vector<4x128xf32>
    %398 = arith.subf %377, %381 : vector<4x128xf32>
    %399 = arith.subf %381, %385 : vector<4x128xf32>
    %400 = arith.subf %385, %389 : vector<4x128xf32>
    %cst_113 = arith.constant 2.500000e+00 : f32
    %401 = vector.broadcast %cst_113 : f32 to vector<4x128xf32>
    %402 = arith.mulf %335, %401 : vector<4x128xf32>
    %cst_114 = arith.constant -5.500000e+00 : f32
    %403 = vector.broadcast %cst_114 : f32 to vector<4x128xf32>
    %404 = arith.subf %402, %403 : vector<4x128xf32>
    %405 = arith.mulf %404, %390 : vector<4x128xf32>
    %cst_115 = arith.constant -3.500000e+00 : f32
    %406 = vector.broadcast %cst_115 : f32 to vector<4x128xf32>
    %407 = arith.subf %406, %402 : vector<4x128xf32>
    %408 = arith.mulf %407, %391 : vector<4x128xf32>
    %409 = arith.addf %405, %408 : vector<4x128xf32>
    %cst_116 = arith.constant -4.500000e+00 : f32
    %410 = vector.broadcast %cst_116 : f32 to vector<4x128xf32>
    %411 = arith.subf %402, %410 : vector<4x128xf32>
    %412 = arith.mulf %411, %391 : vector<4x128xf32>
    %cst_117 = arith.constant -2.500000e+00 : f32
    %413 = vector.broadcast %cst_117 : f32 to vector<4x128xf32>
    %414 = arith.subf %413, %402 : vector<4x128xf32>
    %415 = arith.mulf %414, %392 : vector<4x128xf32>
    %416 = arith.addf %412, %415 : vector<4x128xf32>
    %cst_118 = arith.constant -3.500000e+00 : f32
    %417 = vector.broadcast %cst_118 : f32 to vector<4x128xf32>
    %418 = arith.subf %402, %417 : vector<4x128xf32>
    %419 = arith.mulf %418, %392 : vector<4x128xf32>
    %cst_119 = arith.constant -1.500000e+00 : f32
    %420 = vector.broadcast %cst_119 : f32 to vector<4x128xf32>
    %421 = arith.subf %420, %402 : vector<4x128xf32>
    %422 = arith.mulf %421, %393 : vector<4x128xf32>
    %423 = arith.addf %419, %422 : vector<4x128xf32>
    %cst_120 = arith.constant -2.500000e+00 : f32
    %424 = vector.broadcast %cst_120 : f32 to vector<4x128xf32>
    %425 = arith.subf %402, %424 : vector<4x128xf32>
    %426 = arith.mulf %425, %393 : vector<4x128xf32>
    %cst_121 = arith.constant -5.000000e-01 : f32
    %427 = vector.broadcast %cst_121 : f32 to vector<4x128xf32>
    %428 = arith.subf %427, %402 : vector<4x128xf32>
    %429 = arith.mulf %428, %394 : vector<4x128xf32>
    %430 = arith.addf %426, %429 : vector<4x128xf32>
    %cst_122 = arith.constant -1.500000e+00 : f32
    %431 = vector.broadcast %cst_122 : f32 to vector<4x128xf32>
    %432 = arith.subf %402, %431 : vector<4x128xf32>
    %433 = arith.mulf %432, %394 : vector<4x128xf32>
    %cst_123 = arith.constant 5.000000e-01 : f32
    %434 = vector.broadcast %cst_123 : f32 to vector<4x128xf32>
    %435 = arith.subf %434, %402 : vector<4x128xf32>
    %436 = arith.mulf %435, %395 : vector<4x128xf32>
    %437 = arith.addf %433, %436 : vector<4x128xf32>
    %cst_124 = arith.constant -5.000000e-01 : f32
    %438 = vector.broadcast %cst_124 : f32 to vector<4x128xf32>
    %439 = arith.subf %402, %438 : vector<4x128xf32>
    %440 = arith.mulf %439, %395 : vector<4x128xf32>
    %cst_125 = arith.constant 1.500000e+00 : f32
    %441 = vector.broadcast %cst_125 : f32 to vector<4x128xf32>
    %442 = arith.subf %441, %402 : vector<4x128xf32>
    %443 = arith.mulf %442, %396 : vector<4x128xf32>
    %444 = arith.addf %440, %443 : vector<4x128xf32>
    %cst_126 = arith.constant 5.000000e-01 : f32
    %445 = vector.broadcast %cst_126 : f32 to vector<4x128xf32>
    %446 = arith.subf %402, %445 : vector<4x128xf32>
    %447 = arith.mulf %446, %396 : vector<4x128xf32>
    %cst_127 = arith.constant 2.500000e+00 : f32
    %448 = vector.broadcast %cst_127 : f32 to vector<4x128xf32>
    %449 = arith.subf %448, %402 : vector<4x128xf32>
    %450 = arith.mulf %449, %397 : vector<4x128xf32>
    %451 = arith.addf %447, %450 : vector<4x128xf32>
    %cst_128 = arith.constant 1.500000e+00 : f32
    %452 = vector.broadcast %cst_128 : f32 to vector<4x128xf32>
    %453 = arith.subf %402, %452 : vector<4x128xf32>
    %454 = arith.mulf %453, %397 : vector<4x128xf32>
    %cst_129 = arith.constant 3.500000e+00 : f32
    %455 = vector.broadcast %cst_129 : f32 to vector<4x128xf32>
    %456 = arith.subf %455, %402 : vector<4x128xf32>
    %457 = arith.mulf %456, %398 : vector<4x128xf32>
    %458 = arith.addf %454, %457 : vector<4x128xf32>
    %cst_130 = arith.constant 2.500000e+00 : f32
    %459 = vector.broadcast %cst_130 : f32 to vector<4x128xf32>
    %460 = arith.subf %402, %459 : vector<4x128xf32>
    %461 = arith.mulf %460, %398 : vector<4x128xf32>
    %cst_131 = arith.constant 4.500000e+00 : f32
    %462 = vector.broadcast %cst_131 : f32 to vector<4x128xf32>
    %463 = arith.subf %462, %402 : vector<4x128xf32>
    %464 = arith.mulf %463, %399 : vector<4x128xf32>
    %465 = arith.addf %461, %464 : vector<4x128xf32>
    %cst_132 = arith.constant 3.500000e+00 : f32
    %466 = vector.broadcast %cst_132 : f32 to vector<4x128xf32>
    %467 = arith.subf %402, %466 : vector<4x128xf32>
    %468 = arith.mulf %467, %399 : vector<4x128xf32>
    %cst_133 = arith.constant 5.500000e+00 : f32
    %469 = vector.broadcast %cst_133 : f32 to vector<4x128xf32>
    %470 = arith.subf %469, %402 : vector<4x128xf32>
    %471 = arith.mulf %470, %400 : vector<4x128xf32>
    %472 = arith.addf %468, %471 : vector<4x128xf32>
    %cst_134 = arith.constant 1.250000e+00 : f32
    %473 = vector.broadcast %cst_134 : f32 to vector<4x128xf32>
    %474 = arith.mulf %335, %473 : vector<4x128xf32>
    %cst_135 = arith.constant -2.750000e+00 : f32
    %475 = vector.broadcast %cst_135 : f32 to vector<4x128xf32>
    %476 = arith.subf %474, %475 : vector<4x128xf32>
    %477 = arith.mulf %476, %409 : vector<4x128xf32>
    %cst_136 = arith.constant -1.250000e+00 : f32
    %478 = vector.broadcast %cst_136 : f32 to vector<4x128xf32>
    %479 = arith.subf %478, %474 : vector<4x128xf32>
    %480 = arith.mulf %479, %416 : vector<4x128xf32>
    %481 = arith.addf %477, %480 : vector<4x128xf32>
    %cst_137 = arith.constant -2.250000e+00 : f32
    %482 = vector.broadcast %cst_137 : f32 to vector<4x128xf32>
    %483 = arith.subf %474, %482 : vector<4x128xf32>
    %484 = arith.mulf %483, %416 : vector<4x128xf32>
    %cst_138 = arith.constant -7.500000e-01 : f32
    %485 = vector.broadcast %cst_138 : f32 to vector<4x128xf32>
    %486 = arith.subf %485, %474 : vector<4x128xf32>
    %487 = arith.mulf %486, %423 : vector<4x128xf32>
    %488 = arith.addf %484, %487 : vector<4x128xf32>
    %cst_139 = arith.constant -1.750000e+00 : f32
    %489 = vector.broadcast %cst_139 : f32 to vector<4x128xf32>
    %490 = arith.subf %474, %489 : vector<4x128xf32>
    %491 = arith.mulf %490, %423 : vector<4x128xf32>
    %cst_140 = arith.constant -2.500000e-01 : f32
    %492 = vector.broadcast %cst_140 : f32 to vector<4x128xf32>
    %493 = arith.subf %492, %474 : vector<4x128xf32>
    %494 = arith.mulf %493, %430 : vector<4x128xf32>
    %495 = arith.addf %491, %494 : vector<4x128xf32>
    %cst_141 = arith.constant -1.250000e+00 : f32
    %496 = vector.broadcast %cst_141 : f32 to vector<4x128xf32>
    %497 = arith.subf %474, %496 : vector<4x128xf32>
    %498 = arith.mulf %497, %430 : vector<4x128xf32>
    %cst_142 = arith.constant 2.500000e-01 : f32
    %499 = vector.broadcast %cst_142 : f32 to vector<4x128xf32>
    %500 = arith.subf %499, %474 : vector<4x128xf32>
    %501 = arith.mulf %500, %437 : vector<4x128xf32>
    %502 = arith.addf %498, %501 : vector<4x128xf32>
    %cst_143 = arith.constant -7.500000e-01 : f32
    %503 = vector.broadcast %cst_143 : f32 to vector<4x128xf32>
    %504 = arith.subf %474, %503 : vector<4x128xf32>
    %505 = arith.mulf %504, %437 : vector<4x128xf32>
    %cst_144 = arith.constant 7.500000e-01 : f32
    %506 = vector.broadcast %cst_144 : f32 to vector<4x128xf32>
    %507 = arith.subf %506, %474 : vector<4x128xf32>
    %508 = arith.mulf %507, %444 : vector<4x128xf32>
    %509 = arith.addf %505, %508 : vector<4x128xf32>
    %cst_145 = arith.constant -2.500000e-01 : f32
    %510 = vector.broadcast %cst_145 : f32 to vector<4x128xf32>
    %511 = arith.subf %474, %510 : vector<4x128xf32>
    %512 = arith.mulf %511, %444 : vector<4x128xf32>
    %cst_146 = arith.constant 1.250000e+00 : f32
    %513 = vector.broadcast %cst_146 : f32 to vector<4x128xf32>
    %514 = arith.subf %513, %474 : vector<4x128xf32>
    %515 = arith.mulf %514, %451 : vector<4x128xf32>
    %516 = arith.addf %512, %515 : vector<4x128xf32>
    %cst_147 = arith.constant 2.500000e-01 : f32
    %517 = vector.broadcast %cst_147 : f32 to vector<4x128xf32>
    %518 = arith.subf %474, %517 : vector<4x128xf32>
    %519 = arith.mulf %518, %451 : vector<4x128xf32>
    %cst_148 = arith.constant 1.750000e+00 : f32
    %520 = vector.broadcast %cst_148 : f32 to vector<4x128xf32>
    %521 = arith.subf %520, %474 : vector<4x128xf32>
    %522 = arith.mulf %521, %458 : vector<4x128xf32>
    %523 = arith.addf %519, %522 : vector<4x128xf32>
    %cst_149 = arith.constant 7.500000e-01 : f32
    %524 = vector.broadcast %cst_149 : f32 to vector<4x128xf32>
    %525 = arith.subf %474, %524 : vector<4x128xf32>
    %526 = arith.mulf %525, %458 : vector<4x128xf32>
    %cst_150 = arith.constant 2.250000e+00 : f32
    %527 = vector.broadcast %cst_150 : f32 to vector<4x128xf32>
    %528 = arith.subf %527, %474 : vector<4x128xf32>
    %529 = arith.mulf %528, %465 : vector<4x128xf32>
    %530 = arith.addf %526, %529 : vector<4x128xf32>
    %cst_151 = arith.constant 1.250000e+00 : f32
    %531 = vector.broadcast %cst_151 : f32 to vector<4x128xf32>
    %532 = arith.subf %474, %531 : vector<4x128xf32>
    %533 = arith.mulf %532, %465 : vector<4x128xf32>
    %cst_152 = arith.constant 2.750000e+00 : f32
    %534 = vector.broadcast %cst_152 : f32 to vector<4x128xf32>
    %535 = arith.subf %534, %474 : vector<4x128xf32>
    %536 = arith.mulf %535, %472 : vector<4x128xf32>
    %537 = arith.addf %533, %536 : vector<4x128xf32>
    %cst_153 = arith.constant 0.833333313 : f32
    %538 = vector.broadcast %cst_153 : f32 to vector<4x128xf32>
    %539 = arith.mulf %335, %538 : vector<4x128xf32>
    %cst_154 = arith.constant -1.83333337 : f32
    %540 = vector.broadcast %cst_154 : f32 to vector<4x128xf32>
    %541 = arith.subf %539, %540 : vector<4x128xf32>
    %542 = arith.mulf %541, %481 : vector<4x128xf32>
    %cst_155 = arith.constant -5.000000e-01 : f32
    %543 = vector.broadcast %cst_155 : f32 to vector<4x128xf32>
    %544 = arith.subf %543, %539 : vector<4x128xf32>
    %545 = arith.mulf %544, %488 : vector<4x128xf32>
    %546 = arith.addf %542, %545 : vector<4x128xf32>
    %cst_156 = arith.constant -1.500000e+00 : f32
    %547 = vector.broadcast %cst_156 : f32 to vector<4x128xf32>
    %548 = arith.subf %539, %547 : vector<4x128xf32>
    %549 = arith.mulf %548, %488 : vector<4x128xf32>
    %cst_157 = arith.constant -0.166666672 : f32
    %550 = vector.broadcast %cst_157 : f32 to vector<4x128xf32>
    %551 = arith.subf %550, %539 : vector<4x128xf32>
    %552 = arith.mulf %551, %495 : vector<4x128xf32>
    %553 = arith.addf %549, %552 : vector<4x128xf32>
    %cst_158 = arith.constant -1.16666663 : f32
    %554 = vector.broadcast %cst_158 : f32 to vector<4x128xf32>
    %555 = arith.subf %539, %554 : vector<4x128xf32>
    %556 = arith.mulf %555, %495 : vector<4x128xf32>
    %cst_159 = arith.constant 0.166666672 : f32
    %557 = vector.broadcast %cst_159 : f32 to vector<4x128xf32>
    %558 = arith.subf %557, %539 : vector<4x128xf32>
    %559 = arith.mulf %558, %502 : vector<4x128xf32>
    %560 = arith.addf %556, %559 : vector<4x128xf32>
    %cst_160 = arith.constant -0.833333313 : f32
    %561 = vector.broadcast %cst_160 : f32 to vector<4x128xf32>
    %562 = arith.subf %539, %561 : vector<4x128xf32>
    %563 = arith.mulf %562, %502 : vector<4x128xf32>
    %cst_161 = arith.constant 5.000000e-01 : f32
    %564 = vector.broadcast %cst_161 : f32 to vector<4x128xf32>
    %565 = arith.subf %564, %539 : vector<4x128xf32>
    %566 = arith.mulf %565, %509 : vector<4x128xf32>
    %567 = arith.addf %563, %566 : vector<4x128xf32>
    %cst_162 = arith.constant -5.000000e-01 : f32
    %568 = vector.broadcast %cst_162 : f32 to vector<4x128xf32>
    %569 = arith.subf %539, %568 : vector<4x128xf32>
    %570 = arith.mulf %569, %509 : vector<4x128xf32>
    %cst_163 = arith.constant 0.833333313 : f32
    %571 = vector.broadcast %cst_163 : f32 to vector<4x128xf32>
    %572 = arith.subf %571, %539 : vector<4x128xf32>
    %573 = arith.mulf %572, %516 : vector<4x128xf32>
    %574 = arith.addf %570, %573 : vector<4x128xf32>
    %cst_164 = arith.constant -0.166666672 : f32
    %575 = vector.broadcast %cst_164 : f32 to vector<4x128xf32>
    %576 = arith.subf %539, %575 : vector<4x128xf32>
    %577 = arith.mulf %576, %516 : vector<4x128xf32>
    %cst_165 = arith.constant 1.16666663 : f32
    %578 = vector.broadcast %cst_165 : f32 to vector<4x128xf32>
    %579 = arith.subf %578, %539 : vector<4x128xf32>
    %580 = arith.mulf %579, %523 : vector<4x128xf32>
    %581 = arith.addf %577, %580 : vector<4x128xf32>
    %cst_166 = arith.constant 0.166666672 : f32
    %582 = vector.broadcast %cst_166 : f32 to vector<4x128xf32>
    %583 = arith.subf %539, %582 : vector<4x128xf32>
    %584 = arith.mulf %583, %523 : vector<4x128xf32>
    %cst_167 = arith.constant 1.500000e+00 : f32
    %585 = vector.broadcast %cst_167 : f32 to vector<4x128xf32>
    %586 = arith.subf %585, %539 : vector<4x128xf32>
    %587 = arith.mulf %586, %530 : vector<4x128xf32>
    %588 = arith.addf %584, %587 : vector<4x128xf32>
    %cst_168 = arith.constant 5.000000e-01 : f32
    %589 = vector.broadcast %cst_168 : f32 to vector<4x128xf32>
    %590 = arith.subf %539, %589 : vector<4x128xf32>
    %591 = arith.mulf %590, %530 : vector<4x128xf32>
    %cst_169 = arith.constant 1.83333337 : f32
    %592 = vector.broadcast %cst_169 : f32 to vector<4x128xf32>
    %593 = arith.subf %592, %539 : vector<4x128xf32>
    %594 = arith.mulf %593, %537 : vector<4x128xf32>
    %595 = arith.addf %591, %594 : vector<4x128xf32>
    %c0_170 = arith.constant 0 : index
    %c0_171 = arith.constant 0 : index
    %c0_172 = arith.constant 0 : index
    %c0_173 = arith.constant 0 : index
    %596 = vector.load %arg4[%c0_170, %c0_171, %c0_172, %c0_173] : memref<9x4x4x1xf32, #tpu.memory_space<vmem>>, vector<1x1x4x1xf32>
    %597 = vector.shape_cast %596 : vector<1x1x4x1xf32> to vector<4x1xf32>
    %598 = vector.broadcast %597 : vector<4x1xf32> to vector<4x128xf32>
    %599 = arith.mulf %598, %341 : vector<4x128xf32>
    %c1_174 = arith.constant 1 : index
    %c0_175 = arith.constant 0 : index
    %c0_176 = arith.constant 0 : index
    %c0_177 = arith.constant 0 : index
    %600 = vector.load %arg4[%c1_174, %c0_175, %c0_176, %c0_177] : memref<9x4x4x1xf32, #tpu.memory_space<vmem>>, vector<1x1x4x1xf32>
    %601 = vector.shape_cast %600 : vector<1x1x4x1xf32> to vector<4x1xf32>
    %602 = vector.broadcast %601 : vector<4x1xf32> to vector<4x128xf32>
    %603 = arith.mulf %602, %546 : vector<4x128xf32>
    %604 = arith.addf %599, %603 : vector<4x128xf32>
    %c2_178 = arith.constant 2 : index
    %c0_179 = arith.constant 0 : index
    %c0_180 = arith.constant 0 : index
    %c0_181 = arith.constant 0 : index
    %605 = vector.load %arg4[%c2_178, %c0_179, %c0_180, %c0_181] : memref<9x4x4x1xf32, #tpu.memory_space<vmem>>, vector<1x1x4x1xf32>
    %606 = vector.shape_cast %605 : vector<1x1x4x1xf32> to vector<4x1xf32>
    %607 = vector.broadcast %606 : vector<4x1xf32> to vector<4x128xf32>
    %608 = arith.mulf %607, %553 : vector<4x128xf32>
    %609 = arith.addf %604, %608 : vector<4x128xf32>
    %c3_182 = arith.constant 3 : index
    %c0_183 = arith.constant 0 : index
    %c0_184 = arith.constant 0 : index
    %c0_185 = arith.constant 0 : index
    %610 = vector.load %arg4[%c3_182, %c0_183, %c0_184, %c0_185] : memref<9x4x4x1xf32, #tpu.memory_space<vmem>>, vector<1x1x4x1xf32>
    %611 = vector.shape_cast %610 : vector<1x1x4x1xf32> to vector<4x1xf32>
    %612 = vector.broadcast %611 : vector<4x1xf32> to vector<4x128xf32>
    %613 = arith.mulf %612, %560 : vector<4x128xf32>
    %614 = arith.addf %609, %613 : vector<4x128xf32>
    %c4_186 = arith.constant 4 : index
    %c0_187 = arith.constant 0 : index
    %c0_188 = arith.constant 0 : index
    %c0_189 = arith.constant 0 : index
    %615 = vector.load %arg4[%c4_186, %c0_187, %c0_188, %c0_189] : memref<9x4x4x1xf32, #tpu.memory_space<vmem>>, vector<1x1x4x1xf32>
    %616 = vector.shape_cast %615 : vector<1x1x4x1xf32> to vector<4x1xf32>
    %617 = vector.broadcast %616 : vector<4x1xf32> to vector<4x128xf32>
    %618 = arith.mulf %617, %567 : vector<4x128xf32>
    %619 = arith.addf %614, %618 : vector<4x128xf32>
    %c5_190 = arith.constant 5 : index
    %c0_191 = arith.constant 0 : index
    %c0_192 = arith.constant 0 : index
    %c0_193 = arith.constant 0 : index
    %620 = vector.load %arg4[%c5_190, %c0_191, %c0_192, %c0_193] : memref<9x4x4x1xf32, #tpu.memory_space<vmem>>, vector<1x1x4x1xf32>
    %621 = vector.shape_cast %620 : vector<1x1x4x1xf32> to vector<4x1xf32>
    %622 = vector.broadcast %621 : vector<4x1xf32> to vector<4x128xf32>
    %623 = arith.mulf %622, %574 : vector<4x128xf32>
    %624 = arith.addf %619, %623 : vector<4x128xf32>
    %c6_194 = arith.constant 6 : index
    %c0_195 = arith.constant 0 : index
    %c0_196 = arith.constant 0 : index
    %c0_197 = arith.constant 0 : index
    %625 = vector.load %arg4[%c6_194, %c0_195, %c0_196, %c0_197] : memref<9x4x4x1xf32, #tpu.memory_space<vmem>>, vector<1x1x4x1xf32>
    %626 = vector.shape_cast %625 : vector<1x1x4x1xf32> to vector<4x1xf32>
    %627 = vector.broadcast %626 : vector<4x1xf32> to vector<4x128xf32>
    %628 = arith.mulf %627, %581 : vector<4x128xf32>
    %629 = arith.addf %624, %628 : vector<4x128xf32>
    %c7_198 = arith.constant 7 : index
    %c0_199 = arith.constant 0 : index
    %c0_200 = arith.constant 0 : index
    %c0_201 = arith.constant 0 : index
    %630 = vector.load %arg4[%c7_198, %c0_199, %c0_200, %c0_201] : memref<9x4x4x1xf32, #tpu.memory_space<vmem>>, vector<1x1x4x1xf32>
    %631 = vector.shape_cast %630 : vector<1x1x4x1xf32> to vector<4x1xf32>
    %632 = vector.broadcast %631 : vector<4x1xf32> to vector<4x128xf32>
    %633 = arith.mulf %632, %588 : vector<4x128xf32>
    %634 = arith.addf %629, %633 : vector<4x128xf32>
    %c8_202 = arith.constant 8 : index
    %c0_203 = arith.constant 0 : index
    %c0_204 = arith.constant 0 : index
    %c0_205 = arith.constant 0 : index
    %635 = vector.load %arg4[%c8_202, %c0_203, %c0_204, %c0_205] : memref<9x4x4x1xf32, #tpu.memory_space<vmem>>, vector<1x1x4x1xf32>
    %636 = vector.shape_cast %635 : vector<1x1x4x1xf32> to vector<4x1xf32>
    %637 = vector.broadcast %636 : vector<4x1xf32> to vector<4x128xf32>
    %638 = arith.mulf %637, %595 : vector<4x128xf32>
    %639 = arith.addf %634, %638 : vector<4x128xf32>
    %cst_206 = arith.constant dense<0.000000e+00> : vector<128xf32>
    %640 = vector.multi_reduction <add>, %639, %cst_206 [0] : vector<4x128xf32> to vector<128xf32>
    %641 = vector.shape_cast %640 : vector<128xf32> to vector<1x128xf32>
    %c0_207 = arith.constant 0 : index
    %c1_208 = arith.constant 1 : index
    %c0_209 = arith.constant 0 : index
    %c0_210 = arith.constant 0 : index
    %642 = vector.load %arg4[%c0_207, %c1_208, %c0_209, %c0_210] : memref<9x4x4x1xf32, #tpu.memory_space<vmem>>, vector<1x1x4x1xf32>
    %643 = vector.shape_cast %642 : vector<1x1x4x1xf32> to vector<4x1xf32>
    %644 = vector.broadcast %643 : vector<4x1xf32> to vector<4x128xf32>
    %645 = arith.mulf %644, %341 : vector<4x128xf32>
    %c1_211 = arith.constant 1 : index
    %c1_212 = arith.constant 1 : index
    %c0_213 = arith.constant 0 : index
    %c0_214 = arith.constant 0 : index
    %646 = vector.load %arg4[%c1_211, %c1_212, %c0_213, %c0_214] : memref<9x4x4x1xf32, #tpu.memory_space<vmem>>, vector<1x1x4x1xf32>
    %647 = vector.shape_cast %646 : vector<1x1x4x1xf32> to vector<4x1xf32>
    %648 = vector.broadcast %647 : vector<4x1xf32> to vector<4x128xf32>
    %649 = arith.mulf %648, %546 : vector<4x128xf32>
    %650 = arith.addf %645, %649 : vector<4x128xf32>
    %c2_215 = arith.constant 2 : index
    %c1_216 = arith.constant 1 : index
    %c0_217 = arith.constant 0 : index
    %c0_218 = arith.constant 0 : index
    %651 = vector.load %arg4[%c2_215, %c1_216, %c0_217, %c0_218] : memref<9x4x4x1xf32, #tpu.memory_space<vmem>>, vector<1x1x4x1xf32>
    %652 = vector.shape_cast %651 : vector<1x1x4x1xf32> to vector<4x1xf32>
    %653 = vector.broadcast %652 : vector<4x1xf32> to vector<4x128xf32>
    %654 = arith.mulf %653, %553 : vector<4x128xf32>
    %655 = arith.addf %650, %654 : vector<4x128xf32>
    %c3_219 = arith.constant 3 : index
    %c1_220 = arith.constant 1 : index
    %c0_221 = arith.constant 0 : index
    %c0_222 = arith.constant 0 : index
    %656 = vector.load %arg4[%c3_219, %c1_220, %c0_221, %c0_222] : memref<9x4x4x1xf32, #tpu.memory_space<vmem>>, vector<1x1x4x1xf32>
    %657 = vector.shape_cast %656 : vector<1x1x4x1xf32> to vector<4x1xf32>
    %658 = vector.broadcast %657 : vector<4x1xf32> to vector<4x128xf32>
    %659 = arith.mulf %658, %560 : vector<4x128xf32>
    %660 = arith.addf %655, %659 : vector<4x128xf32>
    %c4_223 = arith.constant 4 : index
    %c1_224 = arith.constant 1 : index
    %c0_225 = arith.constant 0 : index
    %c0_226 = arith.constant 0 : index
    %661 = vector.load %arg4[%c4_223, %c1_224, %c0_225, %c0_226] : memref<9x4x4x1xf32, #tpu.memory_space<vmem>>, vector<1x1x4x1xf32>
    %662 = vector.shape_cast %661 : vector<1x1x4x1xf32> to vector<4x1xf32>
    %663 = vector.broadcast %662 : vector<4x1xf32> to vector<4x128xf32>
    %664 = arith.mulf %663, %567 : vector<4x128xf32>
    %665 = arith.addf %660, %664 : vector<4x128xf32>
    %c5_227 = arith.constant 5 : index
    %c1_228 = arith.constant 1 : index
    %c0_229 = arith.constant 0 : index
    %c0_230 = arith.constant 0 : index
    %666 = vector.load %arg4[%c5_227, %c1_228, %c0_229, %c0_230] : memref<9x4x4x1xf32, #tpu.memory_space<vmem>>, vector<1x1x4x1xf32>
    %667 = vector.shape_cast %666 : vector<1x1x4x1xf32> to vector<4x1xf32>
    %668 = vector.broadcast %667 : vector<4x1xf32> to vector<4x128xf32>
    %669 = arith.mulf %668, %574 : vector<4x128xf32>
    %670 = arith.addf %665, %669 : vector<4x128xf32>
    %c6_231 = arith.constant 6 : index
    %c1_232 = arith.constant 1 : index
    %c0_233 = arith.constant 0 : index
    %c0_234 = arith.constant 0 : index
    %671 = vector.load %arg4[%c6_231, %c1_232, %c0_233, %c0_234] : memref<9x4x4x1xf32, #tpu.memory_space<vmem>>, vector<1x1x4x1xf32>
    %672 = vector.shape_cast %671 : vector<1x1x4x1xf32> to vector<4x1xf32>
    %673 = vector.broadcast %672 : vector<4x1xf32> to vector<4x128xf32>
    %674 = arith.mulf %673, %581 : vector<4x128xf32>
    %675 = arith.addf %670, %674 : vector<4x128xf32>
    %c7_235 = arith.constant 7 : index
    %c1_236 = arith.constant 1 : index
    %c0_237 = arith.constant 0 : index
    %c0_238 = arith.constant 0 : index
    %676 = vector.load %arg4[%c7_235, %c1_236, %c0_237, %c0_238] : memref<9x4x4x1xf32, #tpu.memory_space<vmem>>, vector<1x1x4x1xf32>
    %677 = vector.shape_cast %676 : vector<1x1x4x1xf32> to vector<4x1xf32>
    %678 = vector.broadcast %677 : vector<4x1xf32> to vector<4x128xf32>
    %679 = arith.mulf %678, %588 : vector<4x128xf32>
    %680 = arith.addf %675, %679 : vector<4x128xf32>
    %c8_239 = arith.constant 8 : index
    %c1_240 = arith.constant 1 : index
    %c0_241 = arith.constant 0 : index
    %c0_242 = arith.constant 0 : index
    %681 = vector.load %arg4[%c8_239, %c1_240, %c0_241, %c0_242] : memref<9x4x4x1xf32, #tpu.memory_space<vmem>>, vector<1x1x4x1xf32>
    %682 = vector.shape_cast %681 : vector<1x1x4x1xf32> to vector<4x1xf32>
    %683 = vector.broadcast %682 : vector<4x1xf32> to vector<4x128xf32>
    %684 = arith.mulf %683, %595 : vector<4x128xf32>
    %685 = arith.addf %680, %684 : vector<4x128xf32>
    %cst_243 = arith.constant dense<0.000000e+00> : vector<128xf32>
    %686 = vector.multi_reduction <add>, %685, %cst_243 [0] : vector<4x128xf32> to vector<128xf32>
    %687 = vector.shape_cast %686 : vector<128xf32> to vector<1x128xf32>
    %c0_244 = arith.constant 0 : index
    %c2_245 = arith.constant 2 : index
    %c0_246 = arith.constant 0 : index
    %c0_247 = arith.constant 0 : index
    %688 = vector.load %arg4[%c0_244, %c2_245, %c0_246, %c0_247] : memref<9x4x4x1xf32, #tpu.memory_space<vmem>>, vector<1x1x4x1xf32>
    %689 = vector.shape_cast %688 : vector<1x1x4x1xf32> to vector<4x1xf32>
    %690 = vector.broadcast %689 : vector<4x1xf32> to vector<4x128xf32>
    %691 = arith.mulf %690, %341 : vector<4x128xf32>
    %c1_248 = arith.constant 1 : index
    %c2_249 = arith.constant 2 : index
    %c0_250 = arith.constant 0 : index
    %c0_251 = arith.constant 0 : index
    %692 = vector.load %arg4[%c1_248, %c2_249, %c0_250, %c0_251] : memref<9x4x4x1xf32, #tpu.memory_space<vmem>>, vector<1x1x4x1xf32>
    %693 = vector.shape_cast %692 : vector<1x1x4x1xf32> to vector<4x1xf32>
    %694 = vector.broadcast %693 : vector<4x1xf32> to vector<4x128xf32>
    %695 = arith.mulf %694, %546 : vector<4x128xf32>
    %696 = arith.addf %691, %695 : vector<4x128xf32>
    %c2_252 = arith.constant 2 : index
    %c2_253 = arith.constant 2 : index
    %c0_254 = arith.constant 0 : index
    %c0_255 = arith.constant 0 : index
    %697 = vector.load %arg4[%c2_252, %c2_253, %c0_254, %c0_255] : memref<9x4x4x1xf32, #tpu.memory_space<vmem>>, vector<1x1x4x1xf32>
    %698 = vector.shape_cast %697 : vector<1x1x4x1xf32> to vector<4x1xf32>
    %699 = vector.broadcast %698 : vector<4x1xf32> to vector<4x128xf32>
    %700 = arith.mulf %699, %553 : vector<4x128xf32>
    %701 = arith.addf %696, %700 : vector<4x128xf32>
    %c3_256 = arith.constant 3 : index
    %c2_257 = arith.constant 2 : index
    %c0_258 = arith.constant 0 : index
    %c0_259 = arith.constant 0 : index
    %702 = vector.load %arg4[%c3_256, %c2_257, %c0_258, %c0_259] : memref<9x4x4x1xf32, #tpu.memory_space<vmem>>, vector<1x1x4x1xf32>
    %703 = vector.shape_cast %702 : vector<1x1x4x1xf32> to vector<4x1xf32>
    %704 = vector.broadcast %703 : vector<4x1xf32> to vector<4x128xf32>
    %705 = arith.mulf %704, %560 : vector<4x128xf32>
    %706 = arith.addf %701, %705 : vector<4x128xf32>
    %c4_260 = arith.constant 4 : index
    %c2_261 = arith.constant 2 : index
    %c0_262 = arith.constant 0 : index
    %c0_263 = arith.constant 0 : index
    %707 = vector.load %arg4[%c4_260, %c2_261, %c0_262, %c0_263] : memref<9x4x4x1xf32, #tpu.memory_space<vmem>>, vector<1x1x4x1xf32>
    %708 = vector.shape_cast %707 : vector<1x1x4x1xf32> to vector<4x1xf32>
    %709 = vector.broadcast %708 : vector<4x1xf32> to vector<4x128xf32>
    %710 = arith.mulf %709, %567 : vector<4x128xf32>
    %711 = arith.addf %706, %710 : vector<4x128xf32>
    %c5_264 = arith.constant 5 : index
    %c2_265 = arith.constant 2 : index
    %c0_266 = arith.constant 0 : index
    %c0_267 = arith.constant 0 : index
    %712 = vector.load %arg4[%c5_264, %c2_265, %c0_266, %c0_267] : memref<9x4x4x1xf32, #tpu.memory_space<vmem>>, vector<1x1x4x1xf32>
    %713 = vector.shape_cast %712 : vector<1x1x4x1xf32> to vector<4x1xf32>
    %714 = vector.broadcast %713 : vector<4x1xf32> to vector<4x128xf32>
    %715 = arith.mulf %714, %574 : vector<4x128xf32>
    %716 = arith.addf %711, %715 : vector<4x128xf32>
    %c6_268 = arith.constant 6 : index
    %c2_269 = arith.constant 2 : index
    %c0_270 = arith.constant 0 : index
    %c0_271 = arith.constant 0 : index
    %717 = vector.load %arg4[%c6_268, %c2_269, %c0_270, %c0_271] : memref<9x4x4x1xf32, #tpu.memory_space<vmem>>, vector<1x1x4x1xf32>
    %718 = vector.shape_cast %717 : vector<1x1x4x1xf32> to vector<4x1xf32>
    %719 = vector.broadcast %718 : vector<4x1xf32> to vector<4x128xf32>
    %720 = arith.mulf %719, %581 : vector<4x128xf32>
    %721 = arith.addf %716, %720 : vector<4x128xf32>
    %c7_272 = arith.constant 7 : index
    %c2_273 = arith.constant 2 : index
    %c0_274 = arith.constant 0 : index
    %c0_275 = arith.constant 0 : index
    %722 = vector.load %arg4[%c7_272, %c2_273, %c0_274, %c0_275] : memref<9x4x4x1xf32, #tpu.memory_space<vmem>>, vector<1x1x4x1xf32>
    %723 = vector.shape_cast %722 : vector<1x1x4x1xf32> to vector<4x1xf32>
    %724 = vector.broadcast %723 : vector<4x1xf32> to vector<4x128xf32>
    %725 = arith.mulf %724, %588 : vector<4x128xf32>
    %726 = arith.addf %721, %725 : vector<4x128xf32>
    %c8_276 = arith.constant 8 : index
    %c2_277 = arith.constant 2 : index
    %c0_278 = arith.constant 0 : index
    %c0_279 = arith.constant 0 : index
    %727 = vector.load %arg4[%c8_276, %c2_277, %c0_278, %c0_279] : memref<9x4x4x1xf32, #tpu.memory_space<vmem>>, vector<1x1x4x1xf32>
    %728 = vector.shape_cast %727 : vector<1x1x4x1xf32> to vector<4x1xf32>
    %729 = vector.broadcast %728 : vector<4x1xf32> to vector<4x128xf32>
    %730 = arith.mulf %729, %595 : vector<4x128xf32>
    %731 = arith.addf %726, %730 : vector<4x128xf32>
    %cst_280 = arith.constant dense<0.000000e+00> : vector<128xf32>
    %732 = vector.multi_reduction <add>, %731, %cst_280 [0] : vector<4x128xf32> to vector<128xf32>
    %733 = vector.shape_cast %732 : vector<128xf32> to vector<1x128xf32>
    %c0_281 = arith.constant 0 : index
    %c3_282 = arith.constant 3 : index
    %c0_283 = arith.constant 0 : index
    %c0_284 = arith.constant 0 : index
    %734 = vector.load %arg4[%c0_281, %c3_282, %c0_283, %c0_284] : memref<9x4x4x1xf32, #tpu.memory_space<vmem>>, vector<1x1x4x1xf32>
    %735 = vector.shape_cast %734 : vector<1x1x4x1xf32> to vector<4x1xf32>
    %736 = vector.broadcast %735 : vector<4x1xf32> to vector<4x128xf32>
    %737 = arith.mulf %736, %341 : vector<4x128xf32>
    %c1_285 = arith.constant 1 : index
    %c3_286 = arith.constant 3 : index
    %c0_287 = arith.constant 0 : index
    %c0_288 = arith.constant 0 : index
    %738 = vector.load %arg4[%c1_285, %c3_286, %c0_287, %c0_288] : memref<9x4x4x1xf32, #tpu.memory_space<vmem>>, vector<1x1x4x1xf32>
    %739 = vector.shape_cast %738 : vector<1x1x4x1xf32> to vector<4x1xf32>
    %740 = vector.broadcast %739 : vector<4x1xf32> to vector<4x128xf32>
    %741 = arith.mulf %740, %546 : vector<4x128xf32>
    %742 = arith.addf %737, %741 : vector<4x128xf32>
    %c2_289 = arith.constant 2 : index
    %c3_290 = arith.constant 3 : index
    %c0_291 = arith.constant 0 : index
    %c0_292 = arith.constant 0 : index
    %743 = vector.load %arg4[%c2_289, %c3_290, %c0_291, %c0_292] : memref<9x4x4x1xf32, #tpu.memory_space<vmem>>, vector<1x1x4x1xf32>
    %744 = vector.shape_cast %743 : vector<1x1x4x1xf32> to vector<4x1xf32>
    %745 = vector.broadcast %744 : vector<4x1xf32> to vector<4x128xf32>
    %746 = arith.mulf %745, %553 : vector<4x128xf32>
    %747 = arith.addf %742, %746 : vector<4x128xf32>
    %c3_293 = arith.constant 3 : index
    %c3_294 = arith.constant 3 : index
    %c0_295 = arith.constant 0 : index
    %c0_296 = arith.constant 0 : index
    %748 = vector.load %arg4[%c3_293, %c3_294, %c0_295, %c0_296] : memref<9x4x4x1xf32, #tpu.memory_space<vmem>>, vector<1x1x4x1xf32>
    %749 = vector.shape_cast %748 : vector<1x1x4x1xf32> to vector<4x1xf32>
    %750 = vector.broadcast %749 : vector<4x1xf32> to vector<4x128xf32>
    %751 = arith.mulf %750, %560 : vector<4x128xf32>
    %752 = arith.addf %747, %751 : vector<4x128xf32>
    %c4_297 = arith.constant 4 : index
    %c3_298 = arith.constant 3 : index
    %c0_299 = arith.constant 0 : index
    %c0_300 = arith.constant 0 : index
    %753 = vector.load %arg4[%c4_297, %c3_298, %c0_299, %c0_300] : memref<9x4x4x1xf32, #tpu.memory_space<vmem>>, vector<1x1x4x1xf32>
    %754 = vector.shape_cast %753 : vector<1x1x4x1xf32> to vector<4x1xf32>
    %755 = vector.broadcast %754 : vector<4x1xf32> to vector<4x128xf32>
    %756 = arith.mulf %755, %567 : vector<4x128xf32>
    %757 = arith.addf %752, %756 : vector<4x128xf32>
    %c5_301 = arith.constant 5 : index
    %c3_302 = arith.constant 3 : index
    %c0_303 = arith.constant 0 : index
    %c0_304 = arith.constant 0 : index
    %758 = vector.load %arg4[%c5_301, %c3_302, %c0_303, %c0_304] : memref<9x4x4x1xf32, #tpu.memory_space<vmem>>, vector<1x1x4x1xf32>
    %759 = vector.shape_cast %758 : vector<1x1x4x1xf32> to vector<4x1xf32>
    %760 = vector.broadcast %759 : vector<4x1xf32> to vector<4x128xf32>
    %761 = arith.mulf %760, %574 : vector<4x128xf32>
    %762 = arith.addf %757, %761 : vector<4x128xf32>
    %c6_305 = arith.constant 6 : index
    %c3_306 = arith.constant 3 : index
    %c0_307 = arith.constant 0 : index
    %c0_308 = arith.constant 0 : index
    %763 = vector.load %arg4[%c6_305, %c3_306, %c0_307, %c0_308] : memref<9x4x4x1xf32, #tpu.memory_space<vmem>>, vector<1x1x4x1xf32>
    %764 = vector.shape_cast %763 : vector<1x1x4x1xf32> to vector<4x1xf32>
    %765 = vector.broadcast %764 : vector<4x1xf32> to vector<4x128xf32>
    %766 = arith.mulf %765, %581 : vector<4x128xf32>
    %767 = arith.addf %762, %766 : vector<4x128xf32>
    %c7_309 = arith.constant 7 : index
    %c3_310 = arith.constant 3 : index
    %c0_311 = arith.constant 0 : index
    %c0_312 = arith.constant 0 : index
    %768 = vector.load %arg4[%c7_309, %c3_310, %c0_311, %c0_312] : memref<9x4x4x1xf32, #tpu.memory_space<vmem>>, vector<1x1x4x1xf32>
    %769 = vector.shape_cast %768 : vector<1x1x4x1xf32> to vector<4x1xf32>
    %770 = vector.broadcast %769 : vector<4x1xf32> to vector<4x128xf32>
    %771 = arith.mulf %770, %588 : vector<4x128xf32>
    %772 = arith.addf %767, %771 : vector<4x128xf32>
    %c8_313 = arith.constant 8 : index
    %c3_314 = arith.constant 3 : index
    %c0_315 = arith.constant 0 : index
    %c0_316 = arith.constant 0 : index
    %773 = vector.load %arg4[%c8_313, %c3_314, %c0_315, %c0_316] : memref<9x4x4x1xf32, #tpu.memory_space<vmem>>, vector<1x1x4x1xf32>
    %774 = vector.shape_cast %773 : vector<1x1x4x1xf32> to vector<4x1xf32>
    %775 = vector.broadcast %774 : vector<4x1xf32> to vector<4x128xf32>
    %776 = arith.mulf %775, %595 : vector<4x128xf32>
    %777 = arith.addf %772, %776 : vector<4x128xf32>
    %cst_317 = arith.constant dense<0.000000e+00> : vector<128xf32>
    %778 = vector.multi_reduction <add>, %777, %cst_317 [0] : vector<4x128xf32> to vector<128xf32>
    %779 = vector.shape_cast %778 : vector<128xf32> to vector<1x128xf32>
    %780 = tpu.concatenate %641, %687, %733, %779 in 0 : vector<1x128xf32>, vector<1x128xf32>, vector<1x128xf32>, vector<1x128xf32> -> vector<4x128xf32>
    %c0_318 = arith.constant 0 : index
    %c0_319 = arith.constant 0 : index
    %781 = vector.load %arg5[%c0_318, %c0_319] : memref<4x1xf32, #tpu.memory_space<vmem>>, vector<4x1xf32>
    %782 = vector.broadcast %781 : vector<4x1xf32> to vector<4x128xf32>
    %783 = arith.addf %780, %782 : vector<4x128xf32>
    %c0_320 = arith.constant 0 : index
    %c0_321 = arith.constant 0 : index
    %784 = vector.load %arg6[%c0_320, %c0_321] : memref<4x128xf32, #tpu.memory_space<vmem>>, vector<4x128xf32>
    tpu.vector_store %arg6[%c0_320, %c0_321], %783 {strides = array<i32>} : memref<4x128xf32, #tpu.memory_space<vmem>>, vector<4x128xf32>,
    return
  }
  func.func @transform_0(%arg0: i32) -> (i32, i32) {
    %c0_i32 = arith.constant 0 : i32
    %c0_i32_0 = arith.constant 0 : i32
    return %arg0, %c0_i32 : i32, i32
  }
  func.func @transform_1(%arg0: i32) -> (i32, i32, i32) {
    %c0_i32 = arith.constant 0 : i32
    %c0_i32_0 = arith.constant 0 : i32
    %c0_i32_1 = arith.constant 0 : i32
    %c0_i32_2 = arith.constant 0 : i32
    return %c0_i32, %c0_i32_0, %c0_i32_1 : i32, i32, i32
  }
  func.func @transform_2(%arg0: i32) -> (i32, i32) {
    %c0_i32 = arith.constant 0 : i32
    %c0_i32_0 = arith.constant 0 : i32
    %c0_i32_1 = arith.constant 0 : i32
    return %c0_i32, %c0_i32_0 : i32, i32
  }
  func.func @transform_3(%arg0: i32) -> (i32, i32, i32, i32) {
    %c0_i32 = arith.constant 0 : i32
    %c0_i32_0 = arith.constant 0 : i32
    %c0_i32_1 = arith.constant 0 : i32
    %c0_i32_2 = arith.constant 0 : i32
    %c0_i32_3 = arith.constant 0 : i32
    return %c0_i32, %c0_i32_0, %c0_i32_1, %c0_i32_2 : i32, i32, i32, i32
  }
  func.func @transform_4(%arg0: i32) -> (i32, i32) {
    %c0_i32 = arith.constant 0 : i32
    %c0_i32_0 = arith.constant 0 : i32
    %c0_i32_1 = arith.constant 0 : i32
    return %c0_i32, %c0_i32_0 : i32, i32
  }
  func.func @transform_5(%arg0: i32) -> (i32, i32) {
    %c0_i32 = arith.constant 0 : i32
    %c0_i32_0 = arith.constant 0 : i32
    return %c0_i32, %arg0 : i32, i32
  }
}

</mosaic_0001>

<llo_original>
// kernel: class_vec_forward.1
$region0: #{class_vec_forward.1}
  #allocation0 [shape = 'u32[]', space=smem, size = 0x4, offset = 0x4, fixed_abs, tag = 'smem constant byte address 0x4 - core index']
  #allocation1 [shape = 'u32[72,128]{1,0:T(1,128)}', space=vmem, size = 0x9000, scoped, tag = 'internal scratch']
  %s0 = inlined_call_operand.vmem [shape: f32[128,32], index: 0, kind: input, shape index: {}]
  %s1 = inlined_call_operand.vmem [shape: f32[9,4,1], index: 1, kind: input, shape index: {}]
  %s2 = inlined_call_operand.vmem [shape: f32[4,1], index: 2, kind: input, shape index: {}]
  %s3 = inlined_call_operand.vmem [shape: f32[9,4,4,1], index: 3, kind: input, shape index: {}]
  %s4 = inlined_call_operand.vmem [shape: f32[4,1], index: 4, kind: input, shape index: {}]
  %s5 = inlined_call_operand.vmem [shape: f32[4,128], index: 5, kind: output, shape index: {}]
  %s6 = sld [smem:[#allocation0]]
  $region30: #{class_vec_forward.1} parent=0
    _
  %s8 = ssub.s32 1, %s6
  %s9 = scalar_select 0, %s8, %s6
  // Predicated region
  $region2: #{class_vec_forward.1} parent=0 // pred_check
    _
  $region3: #{class_vec_forward.1} parent=0 // pred_check_branch
    %11 = sbr.rel (0) target = $region5
  $region4: #{class_vec_forward.1} parent=0 // pred_region
    _
  $region5: #{class_vec_forward.1} parent=0 // pred_fallthru
    _
  // Predicated region
  $region6: #{class_vec_forward.1} parent=0 // pred_check
    _
  $region7: #{class_vec_forward.1} parent=0 // pred_check_branch
    %13 = sbr.rel (0) target = $region9
  $region8: #{class_vec_forward.1} parent=0 // pred_region
    _
  $region9: #{class_vec_forward.1} parent=0 // pred_fallthru
    _
  // Predicated region
  $region10: #{class_vec_forward.1} parent=0 // pred_check
    _
  $region11: #{class_vec_forward.1} parent=0 // pred_check_branch
    %15 = sbr.rel (0) target = $region13
  $region12: #{class_vec_forward.1} parent=0 // pred_region
    _
  $region13: #{class_vec_forward.1} parent=0 // pred_fallthru
    _
  // Predicated region
  $region14: #{class_vec_forward.1} parent=0 // pred_check
    _
  $region15: #{class_vec_forward.1} parent=0 // pred_check_branch
    %17 = sbr.rel (0) target = $region17
  $region16: #{class_vec_forward.1} parent=0 // pred_region
    _
  $region17: #{class_vec_forward.1} parent=0 // pred_fallthru
    _
  // Predicated region
  $region18: #{class_vec_forward.1} parent=0 // pred_check
    _
  $region19: #{class_vec_forward.1} parent=0 // pred_check_branch
    %19 = sbr.rel (0) target = $region21
  $region20: #{class_vec_forward.1} parent=0 // pred_region
    _
  $region21: #{class_vec_forward.1} parent=0 // pred_fallthru
    _
  %v20 = vld [vmem:[%s0] sm:$0xff]
  %v21 = vld [vmem:[%s0 + $0x8] sm:$0xff]
  %v22 = vld [vmem:[%s0 + $0x10] sm:$0xff]
  %v23 = vld [vmem:[%s0 + $0x18] sm:$0xff]
  %v24 = vld [vmem:[%s0 + $0x20] sm:$0xff]
  %v25 = vld [vmem:[%s0 + $0x28] sm:$0xff]
  %v26 = vld [vmem:[%s0 + $0x30] sm:$0xff]
  %v27 = vld [vmem:[%s0 + $0x38] sm:$0xff]
  %v28 = vld [vmem:[%s0 + $0x40] sm:$0xff]
  %v29 = vld [vmem:[%s0 + $0x48] sm:$0xff]
  %v30 = vld [vmem:[%s0 + $0x50] sm:$0xff]
  %v31 = vld [vmem:[%s0 + $0x58] sm:$0xff]
  %v32 = vld [vmem:[%s0 + $0x60] sm:$0xff]
  %v33 = vld [vmem:[%s0 + $0x68] sm:$0xff]
  %v34 = vld [vmem:[%s0 + $0x70] sm:$0xff]
  %v35 = vld [vmem:[%s0 + $0x78] sm:$0xff]
  %36 = vxpose.xlu0.b32.start [1/16] %v20, 128
  %37 = vxpose.xlu0.b32.cont [2/16] %v21, 128
  %38 = vxpose.xlu0.b32.cont [3/16] %v22, 128
  %39 = vxpose.xlu0.b32.cont [4/16] %v23, 128
  %40 = vxpose.xlu0.b32.cont [5/16] %v24, 128
  %41 = vxpose.xlu0.b32.cont [6/16] %v25, 128
  %42 = vxpose.xlu0.b32.cont [7/16] %v26, 128
  %43 = vxpose.xlu0.b32.cont [8/16] %v27, 128
  %44 = vxpose.xlu0.b32.cont [9/16] %v28, 128
  %45 = vxpose.xlu0.b32.cont [10/16] %v29, 128
  %46 = vxpose.xlu0.b32.cont [11/16] %v30, 128
  %47 = vxpose.xlu0.b32.cont [12/16] %v31, 128
  %48 = vxpose.xlu0.b32.cont [13/16] %v32, 128
  %49 = vxpose.xlu0.b32.cont [14/16] %v33, 128
  %50 = vxpose.xlu0.b32.cont [15/16] %v34, 128
  %51 = vxpose.xlu0.b32.end [16/16] %v35, 128
  %v52 = vpop.trf.xlu0
  %v53 = vpop.trf.xlu0
  %v54 = vpop.trf.xlu0
  %v55 = vpop.trf.xlu0
  %v56 = vpop.trf.xlu0
  %v57 = vpop.trf.xlu0
  %v58 = vpop.trf.xlu0
  %v59 = vpop.trf.xlu0
  %v60 = vpop.trf.xlu0
  %v61 = vpop.trf.xlu0
  %v62 = vpop.trf.xlu0
  %v63 = vpop.trf.xlu0
  %v64 = vpop.trf.xlu0
  %v65 = vpop.trf.xlu0
  %v66 = vpop.trf.xlu0
  %v67 = vpop.trf.xlu0
  %v68 = vxor.u32 %v52, 2147483648
  %v69 = vxor.u32 %v53, 2147483648
  %v70 = vxor.u32 %v54, 2147483648
  %v71 = vxor.u32 %v55, 2147483648
  %v72 = vmul.f32 %v68, 1.442695
  %v73 = vpow.pop %v72
  %v74 = vmul.f32 %v69, 1.442695
  %v75 = vpow.pop %v74
  %v76 = vmul.f32 %v70, 1.442695
  %v77 = vpow.pop %v76
  %v78 = vmul.f32 %v71, 1.442695
  %v79 = vpow.pop %v78
  %v80 = vadd.f32 %v73, 1.0
  %v81 = vadd.f32 %v75, 1.0
  %v82 = vadd.f32 %v77, 1.0
  %v83 = vadd.f32 %v79, 1.0
  %v84 = vrcp.pop %v80
  %v85 = vmul.f32 %v80, %v84
  %v86 = vsub.f32 1.0, %v85
  %v87 = vmul.f32 %v84, %v86
  %v88 = vadd.f32 %v84, %v87
  %vm89 = vweird.f32 %v80
  %vm90 = vweird.f32 %v84
  %vm91 = vmor %vm89, %vm90
  %v92 = vsel %vm91, %v84, %v88
  %v93 = vand.u32 2147483647, %v80
  %vm94 = vcmp.eq.f32.partialorder %v93, 8.507059e+37
  %v95 = vand.u32 %v80, 2147483648
  %v96 = vor.u32 1.1754944e-38, %v95
  %v97 = vsel %vm94, %v96, %v92
  %v98 = vmul.f32 1.0, %v97
  %v99 = vrcp.pop %v81
  %v100 = vmul.f32 %v81, %v99
  %v101 = vsub.f32 1.0, %v100
  %v102 = vmul.f32 %v99, %v101
  %v103 = vadd.f32 %v99, %v102
  %vm104 = vweird.f32 %v81
  %vm105 = vweird.f32 %v99
  %vm106 = vmor %vm104, %vm105
  %v107 = vsel %vm106, %v99, %v103
  %v108 = vand.u32 2147483647, %v81
  %vm109 = vcmp.eq.f32.partialorder %v108, 8.507059e+37
  %v110 = vand.u32 %v81, 2147483648
  %v111 = vor.u32 1.1754944e-38, %v110
  %v112 = vsel %vm109, %v111, %v107
  %v113 = vmul.f32 1.0, %v112
  %v114 = vrcp.pop %v82
  %v115 = vmul.f32 %v82, %v114
  %v116 = vsub.f32 1.0, %v115
  %v117 = vmul.f32 %v114, %v116
  %v118 = vadd.f32 %v114, %v117
  %vm119 = vweird.f32 %v82
  %vm120 = vweird.f32 %v114
  %vm121 = vmor %vm119, %vm120
  %v122 = vsel %vm121, %v114, %v118
  %v123 = vand.u32 2147483647, %v82
  %vm124 = vcmp.eq.f32.partialorder %v123, 8.507059e+37
  %v125 = vand.u32 %v82, 2147483648
  %v126 = vor.u32 1.1754944e-38, %v125
  %v127 = vsel %vm124, %v126, %v122
  %v128 = vmul.f32 1.0, %v127
  %v129 = vrcp.pop %v83
  %v130 = vmul.f32 %v83, %v129
  %v131 = vsub.f32 1.0, %v130
  %v132 = vmul.f32 %v129, %v131
  %v133 = vadd.f32 %v129, %v132
  %vm134 = vweird.f32 %v83
  %vm135 = vweird.f32 %v129
  %vm136 = vmor %vm134, %vm135
  %v137 = vsel %vm136, %v129, %v133
  %v138 = vand.u32 2147483647, %v83
  %vm139 = vcmp.eq.f32.partialorder %v138, 8.507059e+37
  %v140 = vand.u32 %v83, 2147483648
  %v141 = vor.u32 1.1754944e-38, %v140
  %v142 = vsel %vm139, %v141, %v137
  %v143 = vmul.f32 1.0, %v142
  %v144 = vmul.f32 %v52, %v98
  %v145 = vmul.f32 %v53, %v113
  %v146 = vmul.f32 %v54, %v128
  %v147 = vmul.f32 %v55, %v143
  %vm148 = vcmp.ge.f32.partialorder %v52, -2.2
  %vm149 = vcmp.ge.f32.partialorder %v53, -2.2
  %vm150 = vcmp.ge.f32.partialorder %v54, -2.2
  %vm151 = vcmp.ge.f32.partialorder %v55, -2.2
  %v152 = vsel %vm148, 1, 0
  %v153 = vsel %vm149, 1, 0
  %v154 = vsel %vm150, 1, 0
  %v155 = vsel %vm151, 1, 0
  %v156 = vcvt.s32.f32 %v152
  %v157 = vcvt.s32.f32 %v153
  %v158 = vcvt.s32.f32 %v154
  %v159 = vcvt.s32.f32 %v155
  %vm160 = vcmp.ge.f32.partialorder %v52, -1.8
  %vm161 = vcmp.ge.f32.partialorder %v53, -1.8
  %vm162 = vcmp.ge.f32.partialorder %v54, -1.8
  %vm163 = vcmp.ge.f32.partialorder %v55, -1.8
  %v164 = vsel %vm160, 1, 0
  %v165 = vsel %vm161, 1, 0
  %v166 = vsel %vm162, 1, 0
  %v167 = vsel %vm163, 1, 0
  %v168 = vcvt.s32.f32 %v164
  %v169 = vcvt.s32.f32 %v165
  %v170 = vcvt.s32.f32 %v166
  %v171 = vcvt.s32.f32 %v167
  %vm172 = vcmp.ge.f32.partialorder %v52, -1.4
  %vm173 = vcmp.ge.f32.partialorder %v53, -1.4
  %vm174 = vcmp.ge.f32.partialorder %v54, -1.4
  %vm175 = vcmp.ge.f32.partialorder %v55, -1.4
  %v176 = vsel %vm172, 1, 0
  %v177 = vsel %vm173, 1, 0
  %v178 = vsel %vm174, 1, 0
  %v179 = vsel %vm175, 1, 0
  %v180 = vcvt.s32.f32 %v176
  %v181 = vcvt.s32.f32 %v177
  %v182 = vcvt.s32.f32 %v178
  %v183 = vcvt.s32.f32 %v179
  %vm184 = vcmp.ge.f32.partialorder %v52, -1.0
  %vm185 = vcmp.ge.f32.partialorder %v53, -1.0
  %vm186 = vcmp.ge.f32.partialorder %v54, -1.0
  %vm187 = vcmp.ge.f32.partialorder %v55, -1.0
  %v188 = vsel %vm184, 1, 0
  %v189 = vsel %vm185, 1, 0
  %v190 = vsel %vm186, 1, 0
  %v191 = vsel %vm187, 1, 0
  %v192 = vcvt.s32.f32 %v188
  %v193 = vcvt.s32.f32 %v189
  %v194 = vcvt.s32.f32 %v190
  %v195 = vcvt.s32.f32 %v191
  %vm196 = vcmp.ge.f32.partialorder %v52, -0.6
  %vm197 = vcmp.ge.f32.partialorder %v53, -0.6
  %vm198 = vcmp.ge.f32.partialorder %v54, -0.6
  %vm199 = vcmp.ge.f32.partialorder %v55, -0.6
  %v200 = vsel %vm196, 1, 0
  %v201 = vsel %vm197, 1, 0
  %v202 = vsel %vm198, 1, 0
  %v203 = vsel %vm199, 1, 0
  %v204 = vcvt.s32.f32 %v200
  %v205 = vcvt.s32.f32 %v201
  %v206 = vcvt.s32.f32 %v202
  %v207 = vcvt.s32.f32 %v203
  %vm208 = vcmp.ge.f32.partialorder %v52, -0.2
  %vm209 = vcmp.ge.f32.partialorder %v53, -0.2
  %vm210 = vcmp.ge.f32.partialorder %v54, -0.2
  %vm211 = vcmp.ge.f32.partialorder %v55, -0.2
  %v212 = vsel %vm208, 1, 0
  %v213 = vsel %vm209, 1, 0
  %v214 = vsel %vm210, 1, 0
  %v215 = vsel %vm211, 1, 0
  %v216 = vcvt.s32.f32 %v212
  %v217 = vcvt.s32.f32 %v213
  %v218 = vcvt.s32.f32 %v214
  %v219 = vcvt.s32.f32 %v215
  %vm220 = vcmp.ge.f32.partialorder %v52, 0.2
  %vm221 = vcmp.ge.f32.partialorder %v53, 0.2
  %vm222 = vcmp.ge.f32.partialorder %v54, 0.2
  %vm223 = vcmp.ge.f32.partialorder %v55, 0.2
  %v224 = vsel %vm220, 1, 0
  %v225 = vsel %vm221, 1, 0
  %v226 = vsel %vm222, 1, 0
  %v227 = vsel %vm223, 1, 0
  %v228 = vcvt.s32.f32 %v224
  %v229 = vcvt.s32.f32 %v225
  %v230 = vcvt.s32.f32 %v226
  %v231 = vcvt.s32.f32 %v227
  %vm232 = vcmp.ge.f32.partialorder %v52, 0.6
  %vm233 = vcmp.ge.f32.partialorder %v53, 0.6
  %vm234 = vcmp.ge.f32.partialorder %v54, 0.6
  %vm235 = vcmp.ge.f32.partialorder %v55, 0.6
  %v236 = vsel %vm232, 1, 0
  %v237 = vsel %vm233, 1, 0
  %v238 = vsel %vm234, 1, 0
  %v239 = vsel %vm235, 1, 0
  %v240 = vcvt.s32.f32 %v236
  %v241 = vcvt.s32.f32 %v237
  %v242 = vcvt.s32.f32 %v238
  %v243 = vcvt.s32.f32 %v239
  %vm244 = vcmp.ge.f32.partialorder %v52, 1.0
  %vm245 = vcmp.ge.f32.partialorder %v53, 1.0
  %vm246 = vcmp.ge.f32.partialorder %v54, 1.0
  %vm247 = vcmp.ge.f32.partialorder %v55, 1.0
  %v248 = vsel %vm244, 1, 0
  %v249 = vsel %vm245, 1, 0
  %v250 = vsel %vm246, 1, 0
  %v251 = vsel %vm247, 1, 0
  %v252 = vcvt.s32.f32 %v248
  %v253 = vcvt.s32.f32 %v249
  %v254 = vcvt.s32.f32 %v250
  %v255 = vcvt.s32.f32 %v251
  %vm256 = vcmp.ge.f32.partialorder %v52, 1.4
  %vm257 = vcmp.ge.f32.partialorder %v53, 1.4
  %vm258 = vcmp.ge.f32.partialorder %v54, 1.4
  %vm259 = vcmp.ge.f32.partialorder %v55, 1.4
  %v260 = vsel %vm256, 1, 0
  %v261 = vsel %vm257, 1, 0
  %v262 = vsel %vm258, 1, 0
  %v263 = vsel %vm259, 1, 0
  %v264 = vcvt.s32.f32 %v260
  %v265 = vcvt.s32.f32 %v261
  %v266 = vcvt.s32.f32 %v262
  %v267 = vcvt.s32.f32 %v263
  %vm268 = vcmp.ge.f32.partialorder %v52, 1.8
  %vm269 = vcmp.ge.f32.partialorder %v53, 1.8
  %vm270 = vcmp.ge.f32.partialorder %v54, 1.8
  %vm271 = vcmp.ge.f32.partialorder %v55, 1.8
  %v272 = vsel %vm268, 1, 0
  %v273 = vsel %vm269, 1, 0
  %v274 = vsel %vm270, 1, 0
  %v275 = vsel %vm271, 1, 0
  %v276 = vcvt.s32.f32 %v272
  %v277 = vcvt.s32.f32 %v273
  %v278 = vcvt.s32.f32 %v274
  %v279 = vcvt.s32.f32 %v275
  %vm280 = vcmp.ge.f32.partialorder %v52, 2.2
  %vm281 = vcmp.ge.f32.partialorder %v53, 2.2
  %vm282 = vcmp.ge.f32.partialorder %v54, 2.2
  %vm283 = vcmp.ge.f32.partialorder %v55, 2.2
  %v284 = vsel %vm280, 1, 0
  %v285 = vsel %vm281, 1, 0
  %v286 = vsel %vm282, 1, 0
  %v287 = vsel %vm283, 1, 0
  %v288 = vcvt.s32.f32 %v284
  %v289 = vcvt.s32.f32 %v285
  %v290 = vcvt.s32.f32 %v286
  %v291 = vcvt.s32.f32 %v287
  %v292 = vsub.f32 %v156, %v168
  %v293 = vsub.f32 %v157, %v169
  %v294 = vsub.f32 %v158, %v170
  %v295 = vsub.f32 %v159, %v171
  %v296 = vsub.f32 %v168, %v180
  %v297 = vsub.f32 %v169, %v181
  %v298 = vsub.f32 %v170, %v182
  %v299 = vsub.f32 %v171, %v183
  %v300 = vsub.f32 %v180, %v192
  %v301 = vsub.f32 %v181, %v193
  %v302 = vsub.f32 %v182, %v194
  %v303 = vsub.f32 %v183, %v195
  %v304 = vsub.f32 %v192, %v204
  %v305 = vsub.f32 %v193, %v205
  %v306 = vsub.f32 %v194, %v206
  %v307 = vsub.f32 %v195, %v207
  %v308 = vsub.f32 %v204, %v216
  %v309 = vsub.f32 %v205, %v217
  %v310 = vsub.f32 %v206, %v218
  %v311 = vsub.f32 %v207, %v219
  %v312 = vsub.f32 %v216, %v228
  %v313 = vsub.f32 %v217, %v229
  %v314 = vsub.f32 %v218, %v230
  %v315 = vsub.f32 %v219, %v231
  %v316 = vsub.f32 %v228, %v240
  %v317 = vsub.f32 %v229, %v241
  %v318 = vsub.f32 %v230, %v242
  %v319 = vsub.f32 %v231, %v243
  %v320 = vsub.f32 %v240, %v252
  %v321 = vsub.f32 %v241, %v253
  %v322 = vsub.f32 %v242, %v254
  %v323 = vsub.f32 %v243, %v255
  %v324 = vsub.f32 %v252, %v264
  %v325 = vsub.f32 %v253, %v265
  %v326 = vsub.f32 %v254, %v266
  %v327 = vsub.f32 %v255, %v267
  %v328 = vsub.f32 %v264, %v276
  %v329 = vsub.f32 %v265, %v277
  %v330 = vsub.f32 %v266, %v278
  %v331 = vsub.f32 %v267, %v279
  %v332 = vsub.f32 %v276, %v288
  %v333 = vsub.f32 %v277, %v289
  %v334 = vsub.f32 %v278, %v290
  %v335 = vsub.f32 %v279, %v291
  %v336 = vmul.f32 %v52, 2.5
  %v337 = vmul.f32 %v53, 2.5
  %v338 = vmul.f32 %v54, 2.5
  %v339 = vmul.f32 %v55, 2.5
  %v340 = vsub.f32 %v336, -5.5
  %v341 = vsub.f32 %v337, -5.5
  %v342 = vsub.f32 %v338, -5.5
  %v343 = vsub.f32 %v339, -5.5
  %v344 = vmul.f32 %v340, %v292
  %v345 = vmul.f32 %v341, %v293
  %v346 = vmul.f32 %v342, %v294
  %v347 = vmul.f32 %v343, %v295
  %v348 = vsub.f32 -3.5, %v336
  %v349 = vsub.f32 -3.5, %v337
  %v350 = vsub.f32 -3.5, %v338
  %v351 = vsub.f32 -3.5, %v339
  %v352 = vmul.f32 %v348, %v296
  %v353 = vmul.f32 %v349, %v297
  %v354 = vmul.f32 %v350, %v298
  %v355 = vmul.f32 %v351, %v299
  %v356 = vadd.f32 %v344, %v352
  %v357 = vadd.f32 %v345, %v353
  %v358 = vadd.f32 %v346, %v354
  %v359 = vadd.f32 %v347, %v355
  %v360 = vsub.f32 %v336, -4.5
  %v361 = vsub.f32 %v337, -4.5
  %v362 = vsub.f32 %v338, -4.5
  %v363 = vsub.f32 %v339, -4.5
  %v364 = vmul.f32 %v360, %v296
  %v365 = vmul.f32 %v361, %v297
  %v366 = vmul.f32 %v362, %v298
  %v367 = vmul.f32 %v363, %v299
  %v368 = vsub.f32 -2.5, %v336
  %v369 = vsub.f32 -2.5, %v337
  %v370 = vsub.f32 -2.5, %v338
  %v371 = vsub.f32 -2.5, %v339
  %v372 = vmul.f32 %v368, %v300
  %v373 = vmul.f32 %v369, %v301
  %v374 = vmul.f32 %v370, %v302
  %v375 = vmul.f32 %v371, %v303
  %v376 = vadd.f32 %v364, %v372
  %v377 = vadd.f32 %v365, %v373
  %v378 = vadd.f32 %v366, %v374
  %v379 = vadd.f32 %v367, %v375
  %v380 = vsub.f32 %v336, -3.5
  %v381 = vsub.f32 %v337, -3.5
  %v382 = vsub.f32 %v338, -3.5
  %v383 = vsub.f32 %v339, -3.5
  %v384 = vmul.f32 %v380, %v300
  %v385 = vmul.f32 %v381, %v301
  %v386 = vmul.f32 %v382, %v302
  %v387 = vmul.f32 %v383, %v303
  %v388 = vsub.f32 -1.5, %v336
  %v389 = vsub.f32 -1.5, %v337
  %v390 = vsub.f32 -1.5, %v338
  %v391 = vsub.f32 -1.5, %v339
  %v392 = vmul.f32 %v388, %v304
  %v393 = vmul.f32 %v389, %v305
  %v394 = vmul.f32 %v390, %v306
  %v395 = vmul.f32 %v391, %v307
  %v396 = vadd.f32 %v384, %v392
  %v397 = vadd.f32 %v385, %v393
  %v398 = vadd.f32 %v386, %v394
  %v399 = vadd.f32 %v387, %v395
  %v400 = vsub.f32 %v336, -2.5
  %v401 = vsub.f32 %v337, -2.5
  %v402 = vsub.f32 %v338, -2.5
  %v403 = vsub.f32 %v339, -2.5
  %v404 = vmul.f32 %v400, %v304
  %v405 = vmul.f32 %v401, %v305
  %v406 = vmul.f32 %v402, %v306
  %v407 = vmul.f32 %v403, %v307
  %v408 = vsub.f32 -0.5, %v336
  %v409 = vsub.f32 -0.5, %v337
  %v410 = vsub.f32 -0.5, %v338
  %v411 = vsub.f32 -0.5, %v339
  %v412 = vmul.f32 %v408, %v308
  %v413 = vmul.f32 %v409, %v309
  %v414 = vmul.f32 %v410, %v310
  %v415 = vmul.f32 %v411, %v311
  %v416 = vadd.f32 %v404, %v412
  %v417 = vadd.f32 %v405, %v413
  %v418 = vadd.f32 %v406, %v414
  %v419 = vadd.f32 %v407, %v415
  %v420 = vsub.f32 %v336, -1.5
  %v421 = vsub.f32 %v337, -1.5
  %v422 = vsub.f32 %v338, -1.5
  %v423 = vsub.f32 %v339, -1.5
  %v424 = vmul.f32 %v420, %v308
  %v425 = vmul.f32 %v421, %v309
  %v426 = vmul.f32 %v422, %v310
  %v427 = vmul.f32 %v423, %v311
  %v428 = vsub.f32 0.5, %v336
  %v429 = vsub.f32 0.5, %v337
  %v430 = vsub.f32 0.5, %v338
  %v431 = vsub.f32 0.5, %v339
  %v432 = vmul.f32 %v428, %v312
  %v433 = vmul.f32 %v429, %v313
  %v434 = vmul.f32 %v430, %v314
  %v435 = vmul.f32 %v431, %v315
  %v436 = vadd.f32 %v424, %v432
  %v437 = vadd.f32 %v425, %v433
  %v438 = vadd.f32 %v426, %v434
  %v439 = vadd.f32 %v427, %v435
  %v440 = vsub.f32 %v336, -0.5
  %v441 = vsub.f32 %v337, -0.5
  %v442 = vsub.f32 %v338, -0.5
  %v443 = vsub.f32 %v339, -0.5
  %v444 = vmul.f32 %v440, %v312
  %v445 = vmul.f32 %v441, %v313
  %v446 = vmul.f32 %v442, %v314
  %v447 = vmul.f32 %v443, %v315
  %v448 = vsub.f32 1.5, %v336
  %v449 = vsub.f32 1.5, %v337
  %v450 = vsub.f32 1.5, %v338
  %v451 = vsub.f32 1.5, %v339
  %v452 = vmul.f32 %v448, %v316
  %v453 = vmul.f32 %v449, %v317
  %v454 = vmul.f32 %v450, %v318
  %v455 = vmul.f32 %v451, %v319
  %v456 = vadd.f32 %v444, %v452
  %v457 = vadd.f32 %v445, %v453
  %v458 = vadd.f32 %v446, %v454
  %v459 = vadd.f32 %v447, %v455
  %v460 = vsub.f32 %v336, 0.5
  %v461 = vsub.f32 %v337, 0.5
  %v462 = vsub.f32 %v338, 0.5
  %v463 = vsub.f32 %v339, 0.5
  %v464 = vmul.f32 %v460, %v316
  %v465 = vmul.f32 %v461, %v317
  %v466 = vmul.f32 %v462, %v318
  %v467 = vmul.f32 %v463, %v319
  %v468 = vsub.f32 2.5, %v336
  %v469 = vsub.f32 2.5, %v337
  %v470 = vsub.f32 2.5, %v338
  %v471 = vsub.f32 2.5, %v339
  %v472 = vmul.f32 %v468, %v320
  %v473 = vmul.f32 %v469, %v321
  %v474 = vmul.f32 %v470, %v322
  %v475 = vmul.f32 %v471, %v323
  %v476 = vadd.f32 %v464, %v472
  %v477 = vadd.f32 %v465, %v473
  %v478 = vadd.f32 %v466, %v474
  %v479 = vadd.f32 %v467, %v475
  %v480 = vsub.f32 %v336, 1.5
  %v481 = vsub.f32 %v337, 1.5
  %v482 = vsub.f32 %v338, 1.5
  %v483 = vsub.f32 %v339, 1.5
  %v484 = vmul.f32 %v480, %v320
  %v485 = vmul.f32 %v481, %v321
  %v486 = vmul.f32 %v482, %v322
  %v487 = vmul.f32 %v483, %v323
  %v488 = vsub.f32 3.5, %v336
  %v489 = vsub.f32 3.5, %v337
  %v490 = vsub.f32 3.5, %v338
  %v491 = vsub.f32 3.5, %v339
  %v492 = vmul.f32 %v488, %v324
  %v493 = vmul.f32 %v489, %v325
  %v494 = vmul.f32 %v490, %v326
  %v495 = vmul.f32 %v491, %v327
  %v496 = vadd.f32 %v484, %v492
  %v497 = vadd.f32 %v485, %v493
  %v498 = vadd.f32 %v486, %v494
  %v499 = vadd.f32 %v487, %v495
  %v500 = vsub.f32 %v336, 2.5
  %v501 = vsub.f32 %v337, 2.5
  %v502 = vsub.f32 %v338, 2.5
  %v503 = vsub.f32 %v339, 2.5
  %v504 = vmul.f32 %v500, %v324
  %v505 = vmul.f32 %v501, %v325
  %v506 = vmul.f32 %v502, %v326
  %v507 = vmul.f32 %v503, %v327
  %v508 = vsub.f32 4.5, %v336
  %v509 = vsub.f32 4.5, %v337
  %v510 = vsub.f32 4.5, %v338
  %v511 = vsub.f32 4.5, %v339
  %v512 = vmul.f32 %v508, %v328
  %v513 = vmul.f32 %v509, %v329
  %v514 = vmul.f32 %v510, %v330
  %v515 = vmul.f32 %v511, %v331
  %v516 = vadd.f32 %v504, %v512
  %v517 = vadd.f32 %v505, %v513
  %v518 = vadd.f32 %v506, %v514
  %v519 = vadd.f32 %v507, %v515
  %v520 = vsub.f32 %v336, 3.5
  %v521 = vsub.f32 %v337, 3.5
  %v522 = vsub.f32 %v338, 3.5
  %v523 = vsub.f32 %v339, 3.5
  %v524 = vmul.f32 %v520, %v328
  %v525 = vmul.f32 %v521, %v329
  %v526 = vmul.f32 %v522, %v330
  %v527 = vmul.f32 %v523, %v331
  %v528 = vsub.f32 5.5, %v336
  %v529 = vsub.f32 5.5, %v337
  %v530 = vsub.f32 5.5, %v338
  %v531 = vsub.f32 5.5, %v339
  %v532 = vmul.f32 %v528, %v332
  %v533 = vmul.f32 %v529, %v333
  %v534 = vmul.f32 %v530, %v334
  %v535 = vmul.f32 %v531, %v335
  %v536 = vadd.f32 %v524, %v532
  %v537 = vadd.f32 %v525, %v533
  %v538 = vadd.f32 %v526, %v534
  %v539 = vadd.f32 %v527, %v535
  %v540 = vmul.f32 %v52, 1.25
  %v541 = vmul.f32 %v53, 1.25
  %v542 = vmul.f32 %v54, 1.25
  %v543 = vmul.f32 %v55, 1.25
  %v544 = vsub.f32 %v540, -2.75
  %v545 = vsub.f32 %v541, -2.75
  %v546 = vsub.f32 %v542, -2.75
  %v547 = vsub.f32 %v543, -2.75
  %v548 = vmul.f32 %v544, %v356
  %v549 = vmul.f32 %v545, %v357
  %v550 = vmul.f32 %v546, %v358
  %v551 = vmul.f32 %v547, %v359
  %v552 = vsub.f32 -1.25, %v540
  %v553 = vsub.f32 -1.25, %v541
  %v554 = vsub.f32 -1.25, %v542
  %v555 = vsub.f32 -1.25, %v543
  %v556 = vmul.f32 %v552, %v376
  %v557 = vmul.f32 %v553, %v377
  %v558 = vmul.f32 %v554, %v378
  %v559 = vmul.f32 %v555, %v379
  %v560 = vadd.f32 %v548, %v556
  %v561 = vadd.f32 %v549, %v557
  %v562 = vadd.f32 %v550, %v558
  %v563 = vadd.f32 %v551, %v559
  %v564 = vsub.f32 %v540, -2.25
  %v565 = vsub.f32 %v541, -2.25
  %v566 = vsub.f32 %v542, -2.25
  %v567 = vsub.f32 %v543, -2.25
  %v568 = vmul.f32 %v564, %v376
  %v569 = vmul.f32 %v565, %v377
  %v570 = vmul.f32 %v566, %v378
  %v571 = vmul.f32 %v567, %v379
  %v572 = vsub.f32 -0.75, %v540
  %v573 = vsub.f32 -0.75, %v541
  %v574 = vsub.f32 -0.75, %v542
  %v575 = vsub.f32 -0.75, %v543
  %v576 = vmul.f32 %v572, %v396
  %v577 = vmul.f32 %v573, %v397
  %v578 = vmul.f32 %v574, %v398
  %v579 = vmul.f32 %v575, %v399
  %v580 = vadd.f32 %v568, %v576
  %v581 = vadd.f32 %v569, %v577
  %v582 = vadd.f32 %v570, %v578
  %v583 = vadd.f32 %v571, %v579
  %v584 = vsub.f32 %v540, -1.75
  %v585 = vsub.f32 %v541, -1.75
  %v586 = vsub.f32 %v542, -1.75
  %v587 = vsub.f32 %v543, -1.75
  %v588 = vmul.f32 %v584, %v396
  %v589 = vmul.f32 %v585, %v397
  %v590 = vmul.f32 %v586, %v398
  %v591 = vmul.f32 %v587, %v399
  %v592 = vsub.f32 -0.25, %v540
  %v593 = vsub.f32 -0.25, %v541
  %v594 = vsub.f32 -0.25, %v542
  %v595 = vsub.f32 -0.25, %v543
  %v596 = vmul.f32 %v592, %v416
  %v597 = vmul.f32 %v593, %v417
  %v598 = vmul.f32 %v594, %v418
  %v599 = vmul.f32 %v595, %v419
  %v600 = vadd.f32 %v588, %v596
  %v601 = vadd.f32 %v589, %v597
  %v602 = vadd.f32 %v590, %v598
  %v603 = vadd.f32 %v591, %v599
  %v604 = vsub.f32 %v540, -1.25
  %v605 = vsub.f32 %v541, -1.25
  %v606 = vsub.f32 %v542, -1.25
  %v607 = vsub.f32 %v543, -1.25
  %v608 = vmul.f32 %v604, %v416
  %v609 = vmul.f32 %v605, %v417
  %v610 = vmul.f32 %v606, %v418
  %v611 = vmul.f32 %v607, %v419
  %v612 = vsub.f32 0.25, %v540
  %v613 = vsub.f32 0.25, %v541
  %v614 = vsub.f32 0.25, %v542
  %v615 = vsub.f32 0.25, %v543
  %v616 = vmul.f32 %v612, %v436
  %v617 = vmul.f32 %v613, %v437
  %v618 = vmul.f32 %v614, %v438
  %v619 = vmul.f32 %v615, %v439
  %v620 = vadd.f32 %v608, %v616
  %v621 = vadd.f32 %v609, %v617
  %v622 = vadd.f32 %v610, %v618
  %v623 = vadd.f32 %v611, %v619
  %v624 = vsub.f32 %v540, -0.75
  %v625 = vsub.f32 %v541, -0.75
  %v626 = vsub.f32 %v542, -0.75
  %v627 = vsub.f32 %v543, -0.75
  %v628 = vmul.f32 %v624, %v436
  %v629 = vmul.f32 %v625, %v437
  %v630 = vmul.f32 %v626, %v438
  %v631 = vmul.f32 %v627, %v439
  %v632 = vsub.f32 0.75, %v540
  %v633 = vsub.f32 0.75, %v541
  %v634 = vsub.f32 0.75, %v542
  %v635 = vsub.f32 0.75, %v543
  %v636 = vmul.f32 %v632, %v456
  %v637 = vmul.f32 %v633, %v457
  %v638 = vmul.f32 %v634, %v458
  %v639 = vmul.f32 %v635, %v459
  %v640 = vadd.f32 %v628, %v636
  %v641 = vadd.f32 %v629, %v637
  %v642 = vadd.f32 %v630, %v638
  %v643 = vadd.f32 %v631, %v639
  %v644 = vsub.f32 %v540, -0.25
  %v645 = vsub.f32 %v541, -0.25
  %v646 = vsub.f32 %v542, -0.25
  %v647 = vsub.f32 %v543, -0.25
  %v648 = vmul.f32 %v644, %v456
  %v649 = vmul.f32 %v645, %v457
  %v650 = vmul.f32 %v646, %v458
  %v651 = vmul.f32 %v647, %v459
  %v652 = vsub.f32 1.25, %v540
  %v653 = vsub.f32 1.25, %v541
  %v654 = vsub.f32 1.25, %v542
  %v655 = vsub.f32 1.25, %v543
  %v656 = vmul.f32 %v652, %v476
  %v657 = vmul.f32 %v653, %v477
  %v658 = vmul.f32 %v654, %v478
  %v659 = vmul.f32 %v655, %v479
  %v660 = vadd.f32 %v648, %v656
  %v661 = vadd.f32 %v649, %v657
  %v662 = vadd.f32 %v650, %v658
  %v663 = vadd.f32 %v651, %v659
  %v664 = vsub.f32 %v540, 0.25
  %v665 = vsub.f32 %v541, 0.25
  %v666 = vsub.f32 %v542, 0.25
  %v667 = vsub.f32 %v543, 0.25
  %v668 = vmul.f32 %v664, %v476
  %v669 = vmul.f32 %v665, %v477
  %v670 = vmul.f32 %v666, %v478
  %v671 = vmul.f32 %v667, %v479
  %v672 = vsub.f32 1.75, %v540
  %v673 = vsub.f32 1.75, %v541
  %v674 = vsub.f32 1.75, %v542
  %v675 = vsub.f32 1.75, %v543
  %v676 = vmul.f32 %v672, %v496
  %v677 = vmul.f32 %v673, %v497
  %v678 = vmul.f32 %v674, %v498
  %v679 = vmul.f32 %v675, %v499
  %v680 = vadd.f32 %v668, %v676
  %v681 = vadd.f32 %v669, %v677
  %v682 = vadd.f32 %v670, %v678
  %v683 = vadd.f32 %v671, %v679
  %v684 = vsub.f32 %v540, 0.75
  %v685 = vsub.f32 %v541, 0.75
  %v686 = vsub.f32 %v542, 0.75
  %v687 = vsub.f32 %v543, 0.75
  %v688 = vmul.f32 %v684, %v496
  %v689 = vmul.f32 %v685, %v497
  %v690 = vmul.f32 %v686, %v498
  %v691 = vmul.f32 %v687, %v499
  %v692 = vsub.f32 2.25, %v540
  %v693 = vsub.f32 2.25, %v541
  %v694 = vsub.f32 2.25, %v542
  %v695 = vsub.f32 2.25, %v543
  %v696 = vmul.f32 %v692, %v516
  %v697 = vmul.f32 %v693, %v517
  %v698 = vmul.f32 %v694, %v518
  %v699 = vmul.f32 %v695, %v519
  %v700 = vadd.f32 %v688, %v696
  %v701 = vadd.f32 %v689, %v697
  %v702 = vadd.f32 %v690, %v698
  %v703 = vadd.f32 %v691, %v699
  %v704 = vsub.f32 %v540, 1.25
  %v705 = vsub.f32 %v541, 1.25
  %v706 = vsub.f32 %v542, 1.25
  %v707 = vsub.f32 %v543, 1.25
  %v708 = vmul.f32 %v704, %v516
  %v709 = vmul.f32 %v705, %v517
  %v710 = vmul.f32 %v706, %v518
  %v711 = vmul.f32 %v707, %v519
  %v712 = vsub.f32 2.75, %v540
  %v713 = vsub.f32 2.75, %v541
  %v714 = vsub.f32 2.75, %v542
  %v715 = vsub.f32 2.75, %v543
  %v716 = vmul.f32 %v712, %v536
  %v717 = vmul.f32 %v713, %v537
  %v718 = vmul.f32 %v714, %v538
  %v719 = vmul.f32 %v715, %v539
  %v720 = vadd.f32 %v708, %v716
  %v721 = vadd.f32 %v709, %v717
  %v722 = vadd.f32 %v710, %v718
  %v723 = vadd.f32 %v711, %v719
  %v724 = vmul.f32 %v52, 0.8333333
  %v725 = vmul.f32 %v53, 0.8333333
  %v726 = vmul.f32 %v54, 0.8333333
  %v727 = vmul.f32 %v55, 0.8333333
  %v728 = vsub.f32 %v724, -1.8333334
  %v729 = vsub.f32 %v725, -1.8333334
  %v730 = vsub.f32 %v726, -1.8333334
  %v731 = vsub.f32 %v727, -1.8333334
  %v732 = vmul.f32 %v728, %v560
  %v733 = vmul.f32 %v729, %v561
  %v734 = vmul.f32 %v730, %v562
  %v735 = vmul.f32 %v731, %v563
  %v736 = vsub.f32 -0.5, %v724
  %v737 = vsub.f32 -0.5, %v725
  %v738 = vsub.f32 -0.5, %v726
  %v739 = vsub.f32 -0.5, %v727
  %v740 = vmul.f32 %v736, %v580
  %v741 = vmul.f32 %v737, %v581
  %v742 = vmul.f32 %v738, %v582
  %v743 = vmul.f32 %v739, %v583
  %v744 = vadd.f32 %v732, %v740
  %v745 = vadd.f32 %v733, %v741
  %v746 = vadd.f32 %v734, %v742
  %v747 = vadd.f32 %v735, %v743
  %v748 = vsub.f32 %v724, -1.5
  %v749 = vsub.f32 %v725, -1.5
  %v750 = vsub.f32 %v726, -1.5
  %v751 = vsub.f32 %v727, -1.5
  %v752 = vmul.f32 %v748, %v580
  %v753 = vmul.f32 %v749, %v581
  %v754 = vmul.f32 %v750, %v582
  %v755 = vmul.f32 %v751, %v583
  %v756 = vsub.f32 -0.16666667, %v724
  %v757 = vsub.f32 -0.16666667, %v725
  %v758 = vsub.f32 -0.16666667, %v726
  %v759 = vsub.f32 -0.16666667, %v727
  %v760 = vmul.f32 %v756, %v600
  %v761 = vmul.f32 %v757, %v601
  %v762 = vmul.f32 %v758, %v602
  %v763 = vmul.f32 %v759, %v603
  %v764 = vadd.f32 %v752, %v760
  %v765 = vadd.f32 %v753, %v761
  %v766 = vadd.f32 %v754, %v762
  %v767 = vadd.f32 %v755, %v763
  %v768 = vsub.f32 %v724, -1.1666666
  %v769 = vsub.f32 %v725, -1.1666666
  %v770 = vsub.f32 %v726, -1.1666666
  %v771 = vsub.f32 %v727, -1.1666666
  %v772 = vmul.f32 %v768, %v600
  %v773 = vmul.f32 %v769, %v601
  %v774 = vmul.f32 %v770, %v602
  %v775 = vmul.f32 %v771, %v603
  %v776 = vsub.f32 0.16666667, %v724
  %v777 = vsub.f32 0.16666667, %v725
  %v778 = vsub.f32 0.16666667, %v726
  %v779 = vsub.f32 0.16666667, %v727
  %v780 = vmul.f32 %v776, %v620
  %v781 = vmul.f32 %v777, %v621
  %v782 = vmul.f32 %v778, %v622
  %v783 = vmul.f32 %v779, %v623
  %v784 = vadd.f32 %v772, %v780
  %v785 = vadd.f32 %v773, %v781
  %v786 = vadd.f32 %v774, %v782
  %v787 = vadd.f32 %v775, %v783
  %v788 = vsub.f32 %v724, -0.8333333
  %v789 = vsub.f32 %v725, -0.8333333
  %v790 = vsub.f32 %v726, -0.8333333
  %v791 = vsub.f32 %v727, -0.8333333
  %v792 = vmul.f32 %v788, %v620
  %v793 = vmul.f32 %v789, %v621
  %v794 = vmul.f32 %v790, %v622
  %v795 = vmul.f32 %v791, %v623
  %v796 = vsub.f32 0.5, %v724
  %v797 = vsub.f32 0.5, %v725
  %v798 = vsub.f32 0.5, %v726
  %v799 = vsub.f32 0.5, %v727
  %v800 = vmul.f32 %v796, %v640
  %v801 = vmul.f32 %v797, %v641
  %v802 = vmul.f32 %v798, %v642
  %v803 = vmul.f32 %v799, %v643
  %v804 = vadd.f32 %v792, %v800
  %v805 = vadd.f32 %v793, %v801
  %v806 = vadd.f32 %v794, %v802
  %v807 = vadd.f32 %v795, %v803
  %v808 = vsub.f32 %v724, -0.5
  %v809 = vsub.f32 %v725, -0.5
  %v810 = vsub.f32 %v726, -0.5
  %v811 = vsub.f32 %v727, -0.5
  %v812 = vmul.f32 %v808, %v640
  %v813 = vmul.f32 %v809, %v641
  %v814 = vmul.f32 %v810, %v642
  %v815 = vmul.f32 %v811, %v643
  %v816 = vsub.f32 0.8333333, %v724
  %v817 = vsub.f32 0.8333333, %v725
  %v818 = vsub.f32 0.8333333, %v726
  %v819 = vsub.f32 0.8333333, %v727
  %v820 = vmul.f32 %v816, %v660
  %v821 = vmul.f32 %v817, %v661
  %v822 = vmul.f32 %v818, %v662
  %v823 = vmul.f32 %v819, %v663
  %v824 = vadd.f32 %v812, %v820
  %v825 = vadd.f32 %v813, %v821
  %v826 = vadd.f32 %v814, %v822
  %v827 = vadd.f32 %v815, %v823
  %v828 = vsub.f32 %v724, -0.16666667
  %v829 = vsub.f32 %v725, -0.16666667
  %v830 = vsub.f32 %v726, -0.16666667
  %v831 = vsub.f32 %v727, -0.16666667
  %v832 = vmul.f32 %v828, %v660
  %v833 = vmul.f32 %v829, %v661
  %v834 = vmul.f32 %v830, %v662
  %v835 = vmul.f32 %v831, %v663
  %v836 = vsub.f32 1.1666666, %v724
  %v837 = vsub.f32 1.1666666, %v725
  %v838 = vsub.f32 1.1666666, %v726
  %v839 = vsub.f32 1.1666666, %v727
  %v840 = vmul.f32 %v836, %v680
  %v841 = vmul.f32 %v837, %v681
  %v842 = vmul.f32 %v838, %v682
  %v843 = vmul.f32 %v839, %v683
  %v844 = vadd.f32 %v832, %v840
  %v845 = vadd.f32 %v833, %v841
  %v846 = vadd.f32 %v834, %v842
  %v847 = vadd.f32 %v835, %v843
  %v848 = vsub.f32 %v724, 0.16666667
  %v849 = vsub.f32 %v725, 0.16666667
  %v850 = vsub.f32 %v726, 0.16666667
  %v851 = vsub.f32 %v727, 0.16666667
  %v852 = vmul.f32 %v848, %v680
  %v853 = vmul.f32 %v849, %v681
  %v854 = vmul.f32 %v850, %v682
  %v855 = vmul.f32 %v851, %v683
  %v856 = vsub.f32 1.5, %v724
  %v857 = vsub.f32 1.5, %v725
  %v858 = vsub.f32 1.5, %v726
  %v859 = vsub.f32 1.5, %v727
  %v860 = vmul.f32 %v856, %v700
  %v861 = vmul.f32 %v857, %v701
  %v862 = vmul.f32 %v858, %v702
  %v863 = vmul.f32 %v859, %v703
  %v864 = vadd.f32 %v852, %v860
  %v865 = vadd.f32 %v853, %v861
  %v866 = vadd.f32 %v854, %v862
  %v867 = vadd.f32 %v855, %v863
  %v868 = vsub.f32 %v724, 0.5
  %v869 = vsub.f32 %v725, 0.5
  %v870 = vsub.f32 %v726, 0.5
  %v871 = vsub.f32 %v727, 0.5
  %v872 = vmul.f32 %v868, %v700
  %v873 = vmul.f32 %v869, %v701
  %v874 = vmul.f32 %v870, %v702
  %v875 = vmul.f32 %v871, %v703
  %v876 = vsub.f32 1.8333334, %v724
  %v877 = vsub.f32 1.8333334, %v725
  %v878 = vsub.f32 1.8333334, %v726
  %v879 = vsub.f32 1.8333334, %v727
  %v880 = vmul.f32 %v876, %v720
  %v881 = vmul.f32 %v877, %v721
  %v882 = vmul.f32 %v878, %v722
  %v883 = vmul.f32 %v879, %v723
  %v884 = vadd.f32 %v872, %v880
  %v885 = vadd.f32 %v873, %v881
  %v886 = vadd.f32 %v874, %v882
  %v887 = vadd.f32 %v875, %v883
  %v888 = vld [vmem:[%s1] sm:$0xf]
  %v889 = vadd.f32 %v144, %v145
  %v890 = vadd.f32 %v889, %v146
  %v891 = vadd.f32 %v890, %v147
  %v892 = vrot.slane %v891, 4
  %v893 = vadd.f32 %v891, %v892
  %v894 = vrot.slane %v893, 2
  %v895 = vadd.f32 %v893, %v894
  %v896 = vrot.slane %v895, 1
  %v897 = vadd.f32 %v895, %v896
  %899 = vset.pattern.permute.xlu0 0
  %900 = vperm.xlu0 %899, %v888
  %v901 = vpop.permute.xlu0 %900
  %v903 = vmul.f32 %v901, %v897
  %v904 = vld [vmem:[%s2] sm:$0xf]
  %906 = vset.pattern.permute.xlu0 0
  %907 = vperm.xlu0 %906, %v904
  %v908 = vpop.permute.xlu0 %907
  %v910 = vadd.f32 %v903, %v908
  %s911 = scalar_lea.vmem %s1, 4
  %v912 = vld [vmem:[%s911] sm:$0xf]
  %v913 = vadd.f32 %v744, %v745
  %v914 = vadd.f32 %v913, %v746
  %v915 = vadd.f32 %v914, %v747
  %v916 = vrot.slane %v915, 4
  %v917 = vadd.f32 %v915, %v916
  %v918 = vrot.slane %v917, 2
  %v919 = vadd.f32 %v917, %v918
  %v920 = vrot.slane %v919, 1
  %v921 = vadd.f32 %v919, %v920
  %923 = vset.pattern.permute.xlu0 0
  %924 = vperm.xlu0 %923, %v912
  %v925 = vpop.permute.xlu0 %924
  %v927 = vmul.f32 %v925, %v921
  %v928 = vadd.f32 %v910, %v927
  %s929 = scalar_lea.vmem %s1, 8
  %v930 = vld [vmem:[%s929] sm:$0xf]
  %v931 = vadd.f32 %v764, %v765
  %v932 = vadd.f32 %v931, %v766
  %v933 = vadd.f32 %v932, %v767
  %v934 = vrot.slane %v933, 4
  %v935 = vadd.f32 %v933, %v934
  %v936 = vrot.slane %v935, 2
  %v937 = vadd.f32 %v935, %v936
  %v938 = vrot.slane %v937, 1
  %v939 = vadd.f32 %v937, %v938
  %941 = vset.pattern.permute.xlu0 0
  %942 = vperm.xlu0 %941, %v930
  %v943 = vpop.permute.xlu0 %942
  %v945 = vmul.f32 %v943, %v939
  %v946 = vadd.f32 %v928, %v945
  %s947 = scalar_lea.vmem %s1, 12
  %v948 = vld [vmem:[%s947] sm:$0xf]
  %v949 = vadd.f32 %v784, %v785
  %v950 = vadd.f32 %v949, %v786
  %v951 = vadd.f32 %v950, %v787
  %v952 = vrot.slane %v951, 4
  %v953 = vadd.f32 %v951, %v952
  %v954 = vrot.slane %v953, 2
  %v955 = vadd.f32 %v953, %v954
  %v956 = vrot.slane %v955, 1
  %v957 = vadd.f32 %v955, %v956
  %959 = vset.pattern.permute.xlu0 0
  %960 = vperm.xlu0 %959, %v948
  %v961 = vpop.permute.xlu0 %960
  %v963 = vmul.f32 %v961, %v957
  %v964 = vadd.f32 %v946, %v963
  %s965 = scalar_lea.vmem %s1, 16
  %v966 = vld [vmem:[%s965] sm:$0xf]
  %v967 = vadd.f32 %v804, %v805
  %v968 = vadd.f32 %v967, %v806
  %v969 = vadd.f32 %v968, %v807
  %v970 = vrot.slane %v969, 4
  %v971 = vadd.f32 %v969, %v970
  %v972 = vrot.slane %v971, 2
  %v973 = vadd.f32 %v971, %v972
  %v974 = vrot.slane %v973, 1
  %v975 = vadd.f32 %v973, %v974
  %977 = vset.pattern.permute.xlu0 0
  %978 = vperm.xlu0 %977, %v966
  %v979 = vpop.permute.xlu0 %978
  %v981 = vmul.f32 %v979, %v975
  %v982 = vadd.f32 %v964, %v981
  %s983 = scalar_lea.vmem %s1, 20
  %v984 = vld [vmem:[%s983] sm:$0xf]
  %v985 = vadd.f32 %v824, %v825
  %v986 = vadd.f32 %v985, %v826
  %v987 = vadd.f32 %v986, %v827
  %v988 = vrot.slane %v987, 4
  %v989 = vadd.f32 %v987, %v988
  %v990 = vrot.slane %v989, 2
  %v991 = vadd.f32 %v989, %v990
  %v992 = vrot.slane %v991, 1
  %v993 = vadd.f32 %v991, %v992
  %995 = vset.pattern.permute.xlu0 0
  %996 = vperm.xlu0 %995, %v984
  %v997 = vpop.permute.xlu0 %996
  %v999 = vmul.f32 %v997, %v993
  %v1000 = vadd.f32 %v982, %v999
  %s1001 = scalar_lea.vmem %s1, 24
  %v1002 = vld [vmem:[%s1001] sm:$0xf]
  %v1003 = vadd.f32 %v844, %v845
  %v1004 = vadd.f32 %v1003, %v846
  %v1005 = vadd.f32 %v1004, %v847
  %v1006 = vrot.slane %v1005, 4
  %v1007 = vadd.f32 %v1005, %v1006
  %v1008 = vrot.slane %v1007, 2
  %v1009 = vadd.f32 %v1007, %v1008
  %v1010 = vrot.slane %v1009, 1
  %v1011 = vadd.f32 %v1009, %v1010
  %1013 = vset.pattern.permute.xlu0 0
  %1014 = vperm.xlu0 %1013, %v1002
  %v1015 = vpop.permute.xlu0 %1014
  %v1017 = vmul.f32 %v1015, %v1011
  %v1018 = vadd.f32 %v1000, %v1017
  %s1019 = scalar_lea.vmem %s1, 28
  %v1020 = vld [vmem:[%s1019] sm:$0xf]
  %v1021 = vadd.f32 %v864, %v865
  %v1022 = vadd.f32 %v1021, %v866
  %v1023 = vadd.f32 %v1022, %v867
  %v1024 = vrot.slane %v1023, 4
  %v1025 = vadd.f32 %v1023, %v1024
  %v1026 = vrot.slane %v1025, 2
  %v1027 = vadd.f32 %v1025, %v1026
  %v1028 = vrot.slane %v1027, 1
  %v1029 = vadd.f32 %v1027, %v1028
  %1031 = vset.pattern.permute.xlu0 0
  %1032 = vperm.xlu0 %1031, %v1020
  %v1033 = vpop.permute.xlu0 %1032
  %v1035 = vmul.f32 %v1033, %v1029
  %v1036 = vadd.f32 %v1018, %v1035
  %s1037 = scalar_lea.vmem %s1, 32
  %v1038 = vld [vmem:[%s1037] sm:$0xf]
  %v1039 = vadd.f32 %v884, %v885
  %v1040 = vadd.f32 %v1039, %v886
  %v1041 = vadd.f32 %v1040, %v887
  %v1042 = vrot.slane %v1041, 4
  %v1043 = vadd.f32 %v1041, %v1042
  %v1044 = vrot.slane %v1043, 2
  %v1045 = vadd.f32 %v1043, %v1044
  %v1046 = vrot.slane %v1045, 1
  %v1047 = vadd.f32 %v1045, %v1046
  %1049 = vset.pattern.permute.xlu0 0
  %1050 = vperm.xlu0 %1049, %v1038
  %v1051 = vpop.permute.xlu0 %1050
  %v1053 = vmul.f32 %v1051, %v1047
  %v1054 = vadd.f32 %v1036, %v1053
  %v1055 = vxor.u32 %v1054, 2147483648
  %v1056 = vmul.f32 %v1055, 1.442695
  %v1057 = vpow.pop %v1056
  %v1058 = vadd.f32 %v1057, 1.0
  %v1059 = vrcp.pop %v1058
  %v1060 = vmul.f32 %v1058, %v1059
  %v1061 = vsub.f32 1.0, %v1060
  %v1062 = vmul.f32 %v1059, %v1061
  %v1063 = vadd.f32 %v1059, %v1062
  %vm1064 = vweird.f32 %v1058
  %vm1065 = vweird.f32 %v1059
  %vm1066 = vmor %vm1064, %vm1065
  %v1067 = vsel %vm1066, %v1059, %v1063
  %v1068 = vand.u32 2147483647, %v1058
  %vm1069 = vcmp.eq.f32.partialorder %v1068, 8.507059e+37
  %v1070 = vand.u32 %v1058, 2147483648
  %v1071 = vor.u32 1.1754944e-38, %v1070
  %v1072 = vsel %vm1069, %v1071, %v1067
  %v1073 = vmul.f32 1.0, %v1072
  %v1074 = vmul.f32 %v1054, %v1073
  %vm1075 = vcmp.ge.f32.partialorder %v1054, -2.2
  %v1076 = vsel %vm1075, 1, 0
  %v1077 = vcvt.s32.f32 %v1076
  %vm1078 = vcmp.ge.f32.partialorder %v1054, -1.8
  %v1079 = vsel %vm1078, 1, 0
  %v1080 = vcvt.s32.f32 %v1079
  %vm1081 = vcmp.ge.f32.partialorder %v1054, -1.4
  %v1082 = vsel %vm1081, 1, 0
  %v1083 = vcvt.s32.f32 %v1082
  %vm1084 = vcmp.ge.f32.partialorder %v1054, -1.0
  %v1085 = vsel %vm1084, 1, 0
  %v1086 = vcvt.s32.f32 %v1085
  %vm1087 = vcmp.ge.f32.partialorder %v1054, -0.6
  %v1088 = vsel %vm1087, 1, 0
  %v1089 = vcvt.s32.f32 %v1088
  %vm1090 = vcmp.ge.f32.partialorder %v1054, -0.2
  %v1091 = vsel %vm1090, 1, 0
  %v1092 = vcvt.s32.f32 %v1091
  %vm1093 = vcmp.ge.f32.partialorder %v1054, 0.2
  %v1094 = vsel %vm1093, 1, 0
  %v1095 = vcvt.s32.f32 %v1094
  %vm1096 = vcmp.ge.f32.partialorder %v1054, 0.6
  %v1097 = vsel %vm1096, 1, 0
  %v1098 = vcvt.s32.f32 %v1097
  %vm1099 = vcmp.ge.f32.partialorder %v1054, 1.0
  %v1100 = vsel %vm1099, 1, 0
  %v1101 = vcvt.s32.f32 %v1100
  %vm1102 = vcmp.ge.f32.partialorder %v1054, 1.4
  %v1103 = vsel %vm1102, 1, 0
  %v1104 = vcvt.s32.f32 %v1103
  %vm1105 = vcmp.ge.f32.partialorder %v1054, 1.8
  %v1106 = vsel %vm1105, 1, 0
  %v1107 = vcvt.s32.f32 %v1106
  %vm1108 = vcmp.ge.f32.partialorder %v1054, 2.2
  %v1109 = vsel %vm1108, 1, 0
  %v1110 = vcvt.s32.f32 %v1109
  %v1111 = vsub.f32 %v1077, %v1080
  %v1112 = vsub.f32 %v1080, %v1083
  %v1113 = vsub.f32 %v1083, %v1086
  %v1114 = vsub.f32 %v1086, %v1089
  %v1115 = vsub.f32 %v1089, %v1092
  %v1116 = vsub.f32 %v1092, %v1095
  %v1117 = vsub.f32 %v1095, %v1098
  %v1118 = vsub.f32 %v1098, %v1101
  %v1119 = vsub.f32 %v1101, %v1104
  %v1120 = vsub.f32 %v1104, %v1107
  %v1121 = vsub.f32 %v1107, %v1110
  %v1122 = vmul.f32 %v1054, 2.5
  %v1123 = vsub.f32 %v1122, -5.5
  %v1124 = vmul.f32 %v1123, %v1111
  %v1125 = vsub.f32 -3.5, %v1122
  %v1126 = vmul.f32 %v1125, %v1112
  %v1127 = vadd.f32 %v1124, %v1126
  %v1128 = vsub.f32 %v1122, -4.5
  %v1129 = vmul.f32 %v1128, %v1112
  %v1130 = vsub.f32 -2.5, %v1122
  %v1131 = vmul.f32 %v1130, %v1113
  %v1132 = vadd.f32 %v1129, %v1131
  %v1133 = vsub.f32 %v1122, -3.5
  %v1134 = vmul.f32 %v1133, %v1113
  %v1135 = vsub.f32 -1.5, %v1122
  %v1136 = vmul.f32 %v1135, %v1114
  %v1137 = vadd.f32 %v1134, %v1136
  %v1138 = vsub.f32 %v1122, -2.5
  %v1139 = vmul.f32 %v1138, %v1114
  %v1140 = vsub.f32 -0.5, %v1122
  %v1141 = vmul.f32 %v1140, %v1115
  %v1142 = vadd.f32 %v1139, %v1141
  %v1143 = vsub.f32 %v1122, -1.5
  %v1144 = vmul.f32 %v1143, %v1115
  %v1145 = vsub.f32 0.5, %v1122
  %v1146 = vmul.f32 %v1145, %v1116
  %v1147 = vadd.f32 %v1144, %v1146
  %v1148 = vsub.f32 %v1122, -0.5
  %v1149 = vmul.f32 %v1148, %v1116
  %v1150 = vsub.f32 1.5, %v1122
  %v1151 = vmul.f32 %v1150, %v1117
  %v1152 = vadd.f32 %v1149, %v1151
  %v1153 = vsub.f32 %v1122, 0.5
  %v1154 = vmul.f32 %v1153, %v1117
  %v1155 = vsub.f32 2.5, %v1122
  %v1156 = vmul.f32 %v1155, %v1118
  %v1157 = vadd.f32 %v1154, %v1156
  %v1158 = vsub.f32 %v1122, 1.5
  %v1159 = vmul.f32 %v1158, %v1118
  %v1160 = vsub.f32 3.5, %v1122
  %v1161 = vmul.f32 %v1160, %v1119
  %v1162 = vadd.f32 %v1159, %v1161
  %v1163 = vsub.f32 %v1122, 2.5
  %v1164 = vmul.f32 %v1163, %v1119
  %v1165 = vsub.f32 4.5, %v1122
  %v1166 = vmul.f32 %v1165, %v1120
  %v1167 = vadd.f32 %v1164, %v1166
  %v1168 = vsub.f32 %v1122, 3.5
  %v1169 = vmul.f32 %v1168, %v1120
  %v1170 = vsub.f32 5.5, %v1122
  %v1171 = vmul.f32 %v1170, %v1121
  %v1172 = vadd.f32 %v1169, %v1171
  %v1173 = vmul.f32 %v1054, 1.25
  %v1174 = vsub.f32 %v1173, -2.75
  %v1175 = vmul.f32 %v1174, %v1127
  %v1176 = vsub.f32 -1.25, %v1173
  %v1177 = vmul.f32 %v1176, %v1132
  %v1178 = vadd.f32 %v1175, %v1177
  %v1179 = vsub.f32 %v1173, -2.25
  %v1180 = vmul.f32 %v1179, %v1132
  %v1181 = vsub.f32 -0.75, %v1173
  %v1182 = vmul.f32 %v1181, %v1137
  %v1183 = vadd.f32 %v1180, %v1182
  %v1184 = vsub.f32 %v1173, -1.75
  %v1185 = vmul.f32 %v1184, %v1137
  %v1186 = vsub.f32 -0.25, %v1173
  %v1187 = vmul.f32 %v1186, %v1142
  %v1188 = vadd.f32 %v1185, %v1187
  %v1189 = vsub.f32 %v1173, -1.25
  %v1190 = vmul.f32 %v1189, %v1142
  %v1191 = vsub.f32 0.25, %v1173
  %v1192 = vmul.f32 %v1191, %v1147
  %v1193 = vadd.f32 %v1190, %v1192
  %v1194 = vsub.f32 %v1173, -0.75
  %v1195 = vmul.f32 %v1194, %v1147
  %v1196 = vsub.f32 0.75, %v1173
  %v1197 = vmul.f32 %v1196, %v1152
  %v1198 = vadd.f32 %v1195, %v1197
  %v1199 = vsub.f32 %v1173, -0.25
  %v1200 = vmul.f32 %v1199, %v1152
  %v1201 = vsub.f32 1.25, %v1173
  %v1202 = vmul.f32 %v1201, %v1157
  %v1203 = vadd.f32 %v1200, %v1202
  %v1204 = vsub.f32 %v1173, 0.25
  %v1205 = vmul.f32 %v1204, %v1157
  %v1206 = vsub.f32 1.75, %v1173
  %v1207 = vmul.f32 %v1206, %v1162
  %v1208 = vadd.f32 %v1205, %v1207
  %v1209 = vsub.f32 %v1173, 0.75
  %v1210 = vmul.f32 %v1209, %v1162
  %v1211 = vsub.f32 2.25, %v1173
  %v1212 = vmul.f32 %v1211, %v1167
  %v1213 = vadd.f32 %v1210, %v1212
  %v1214 = vsub.f32 %v1173, 1.25
  %v1215 = vmul.f32 %v1214, %v1167
  %v1216 = vsub.f32 2.75, %v1173
  %v1217 = vmul.f32 %v1216, %v1172
  %v1218 = vadd.f32 %v1215, %v1217
  %v1219 = vmul.f32 %v1054, 0.8333333
  %v1220 = vsub.f32 %v1219, -1.8333334
  %v1221 = vmul.f32 %v1220, %v1178
  %v1222 = vsub.f32 -0.5, %v1219
  %v1223 = vmul.f32 %v1222, %v1183
  %v1224 = vadd.f32 %v1221, %v1223
  %v1225 = vsub.f32 %v1219, -1.5
  %v1226 = vmul.f32 %v1225, %v1183
  %v1227 = vsub.f32 -0.16666667, %v1219
  %v1228 = vmul.f32 %v1227, %v1188
  %v1229 = vadd.f32 %v1226, %v1228
  %v1230 = vsub.f32 %v1219, -1.1666666
  %v1231 = vmul.f32 %v1230, %v1188
  %v1232 = vsub.f32 0.16666667, %v1219
  %v1233 = vmul.f32 %v1232, %v1193
  %v1234 = vadd.f32 %v1231, %v1233
  %v1235 = vsub.f32 %v1219, -0.8333333
  %v1236 = vmul.f32 %v1235, %v1193
  %v1237 = vsub.f32 0.5, %v1219
  %v1238 = vmul.f32 %v1237, %v1198
  %v1239 = vadd.f32 %v1236, %v1238
  %v1240 = vsub.f32 %v1219, -0.5
  %v1241 = vmul.f32 %v1240, %v1198
  %v1242 = vsub.f32 0.8333333, %v1219
  %v1243 = vmul.f32 %v1242, %v1203
  %v1244 = vadd.f32 %v1241, %v1243
  %v1245 = vsub.f32 %v1219, -0.16666667
  %v1246 = vmul.f32 %v1245, %v1203
  %v1247 = vsub.f32 1.1666666, %v1219
  %v1248 = vmul.f32 %v1247, %v1208
  %v1249 = vadd.f32 %v1246, %v1248
  %v1250 = vsub.f32 %v1219, 0.16666667
  %v1251 = vmul.f32 %v1250, %v1208
  %v1252 = vsub.f32 1.5, %v1219
  %v1253 = vmul.f32 %v1252, %v1213
  %v1254 = vadd.f32 %v1251, %v1253
  %v1255 = vsub.f32 %v1219, 0.5
  %v1256 = vmul.f32 %v1255, %v1213
  %v1257 = vsub.f32 1.8333334, %v1219
  %v1258 = vmul.f32 %v1257, %v1218
  %v1259 = vadd.f32 %v1256, %v1258
  %v1260 = vld [vmem:[%s3] sm:$0xf]
  %1262 = vset.pattern.permute.xlu0 0
  %1263 = vperm.xlu0 %1262, %v1260
  %v1264 = vpop.permute.xlu0 %1263
  %v1266 = vmul.f32 %v1264, %v1074
  %s1267 = scalar_lea.vmem %s3, 16
  %v1268 = vld [vmem:[%s1267] sm:$0xf]
  %1270 = vset.pattern.permute.xlu0 0
  %1271 = vperm.xlu0 %1270, %v1268
  %v1272 = vpop.permute.xlu0 %1271
  %v1274 = vmul.f32 %v1272, %v1224
  %v1275 = vadd.f32 %v1266, %v1274
  %s1276 = scalar_lea.vmem %s3, 32
  %v1277 = vld [vmem:[%s1276] sm:$0xf]
  %1279 = vset.pattern.permute.xlu0 0
  %1280 = vperm.xlu0 %1279, %v1277
  %v1281 = vpop.permute.xlu0 %1280
  %v1283 = vmul.f32 %v1281, %v1229
  %v1284 = vadd.f32 %v1275, %v1283
  %s1285 = scalar_lea.vmem %s3, 48
  %v1286 = vld [vmem:[%s1285] sm:$0xf]
  %1288 = vset.pattern.permute.xlu0 0
  %1289 = vperm.xlu0 %1288, %v1286
  %v1290 = vpop.permute.xlu0 %1289
  %v1292 = vmul.f32 %v1290, %v1234
  %v1293 = vadd.f32 %v1284, %v1292
  %s1294 = scalar_lea.vmem %s3, 64
  %v1295 = vld [vmem:[%s1294] sm:$0xf]
  %1297 = vset.pattern.permute.xlu0 0
  %1298 = vperm.xlu0 %1297, %v1295
  %v1299 = vpop.permute.xlu0 %1298
  %v1301 = vmul.f32 %v1299, %v1239
  %v1302 = vadd.f32 %v1293, %v1301
  %s1303 = scalar_lea.vmem %s3, 80
  %v1304 = vld [vmem:[%s1303] sm:$0xf]
  %1306 = vset.pattern.permute.xlu0 0
  %1307 = vperm.xlu0 %1306, %v1304
  %v1308 = vpop.permute.xlu0 %1307
  %v1310 = vmul.f32 %v1308, %v1244
  %v1311 = vadd.f32 %v1302, %v1310
  %s1312 = scalar_lea.vmem %s3, 96
  %v1313 = vld [vmem:[%s1312] sm:$0xf]
  %1315 = vset.pattern.permute.xlu0 0
  %1316 = vperm.xlu0 %1315, %v1313
  %v1317 = vpop.permute.xlu0 %1316
  %v1319 = vmul.f32 %v1317, %v1249
  %v1320 = vadd.f32 %v1311, %v1319
  %s1321 = scalar_lea.vmem %s3, 112
  %v1322 = vld [vmem:[%s1321] sm:$0xf]
  %1324 = vset.pattern.permute.xlu0 0
  %1325 = vperm.xlu0 %1324, %v1322
  %v1326 = vpop.permute.xlu0 %1325
  %v1328 = vmul.f32 %v1326, %v1254
  %v1329 = vadd.f32 %v1320, %v1328
  %s1330 = scalar_lea.vmem %s3, 128
  %v1331 = vld [vmem:[%s1330] sm:$0xf]
  %1333 = vset.pattern.permute.xlu0 0
  %1334 = vperm.xlu0 %1333, %v1331
  %v1335 = vpop.permute.xlu0 %1334
  %v1337 = vmul.f32 %v1335, %v1259
  %v1338 = vadd.f32 %v1329, %v1337
  %vm1339 = vcmask 1043456
  %v1340 = vsel %vm1339, %v1338, 0.0
  %v1341 = vrot.slane %v1340, 4
  %v1342 = vadd.f32 %v1340, %v1341
  %v1343 = vrot.slane %v1342, 2
  %v1344 = vadd.f32 %v1342, %v1343
  %v1345 = vrot.slane %v1344, 1
  %v1346 = vadd.f32 %v1344, %v1345
  %s1347 = scalar_lea.vmem %s3, 4
  %v1348 = vld [vmem:[%s1347] sm:$0xf]
  %1350 = vset.pattern.permute.xlu0 0
  %1351 = vperm.xlu0 %1350, %v1348
  %v1352 = vpop.permute.xlu0 %1351
  %v1354 = vmul.f32 %v1352, %v1074
  %s1355 = scalar_lea.vmem %s3, 20
  %v1356 = vld [vmem:[%s1355] sm:$0xf]
  %1358 = vset.pattern.permute.xlu0 0
  %1359 = vperm.xlu0 %1358, %v1356
  %v1360 = vpop.permute.xlu0 %1359
  %v1362 = vmul.f32 %v1360, %v1224
  %v1363 = vadd.f32 %v1354, %v1362
  %s1364 = scalar_lea.vmem %s3, 36
  %v1365 = vld [vmem:[%s1364] sm:$0xf]
  %1367 = vset.pattern.permute.xlu0 0
  %1368 = vperm.xlu0 %1367, %v1365
  %v1369 = vpop.permute.xlu0 %1368
  %v1371 = vmul.f32 %v1369, %v1229
  %v1372 = vadd.f32 %v1363, %v1371
  %s1373 = scalar_lea.vmem %s3, 52
  %v1374 = vld [vmem:[%s1373] sm:$0xf]
  %1376 = vset.pattern.permute.xlu0 0
  %1377 = vperm.xlu0 %1376, %v1374
  %v1378 = vpop.permute.xlu0 %1377
  %v1380 = vmul.f32 %v1378, %v1234
  %v1381 = vadd.f32 %v1372, %v1380
  %s1382 = scalar_lea.vmem %s3, 68
  %v1383 = vld [vmem:[%s1382] sm:$0xf]
  %1385 = vset.pattern.permute.xlu0 0
  %1386 = vperm.xlu0 %1385, %v1383
  %v1387 = vpop.permute.xlu0 %1386
  %v1389 = vmul.f32 %v1387, %v1239
  %v1390 = vadd.f32 %v1381, %v1389
  %s1391 = scalar_lea.vmem %s3, 84
  %v1392 = vld [vmem:[%s1391] sm:$0xf]
  %1394 = vset.pattern.permute.xlu0 0
  %1395 = vperm.xlu0 %1394, %v1392
  %v1396 = vpop.permute.xlu0 %1395
  %v1398 = vmul.f32 %v1396, %v1244
  %v1399 = vadd.f32 %v1390, %v1398
  %s1400 = scalar_lea.vmem %s3, 100
  %v1401 = vld [vmem:[%s1400] sm:$0xf]
  %1403 = vset.pattern.permute.xlu0 0
  %1404 = vperm.xlu0 %1403, %v1401
  %v1405 = vpop.permute.xlu0 %1404
  %v1407 = vmul.f32 %v1405, %v1249
  %v1408 = vadd.f32 %v1399, %v1407
  %s1409 = scalar_lea.vmem %s3, 116
  %v1410 = vld [vmem:[%s1409] sm:$0xf]
  %1412 = vset.pattern.permute.xlu0 0
  %1413 = vperm.xlu0 %1412, %v1410
  %v1414 = vpop.permute.xlu0 %1413
  %v1416 = vmul.f32 %v1414, %v1254
  %v1417 = vadd.f32 %v1408, %v1416
  %s1418 = scalar_lea.vmem %s3, 132
  %v1419 = vld [vmem:[%s1418] sm:$0xf]
  %1421 = vset.pattern.permute.xlu0 0
  %1422 = vperm.xlu0 %1421, %v1419
  %v1423 = vpop.permute.xlu0 %1422
  %v1425 = vmul.f32 %v1423, %v1259
  %v1426 = vadd.f32 %v1417, %v1425
  %v1427 = vsel %vm1339, %v1426, 0.0
  %v1428 = vrot.slane %v1427, 4
  %v1429 = vadd.f32 %v1427, %v1428
  %v1430 = vrot.slane %v1429, 2
  %v1431 = vadd.f32 %v1429, %v1430
  %v1432 = vrot.slane %v1431, 1
  %v1433 = vadd.f32 %v1431, %v1432
  %s1434 = scalar_lea.vmem %s3, 8
  %v1435 = vld [vmem:[%s1434] sm:$0xf]
  %1437 = vset.pattern.permute.xlu0 0
  %1438 = vperm.xlu0 %1437, %v1435
  %v1439 = vpop.permute.xlu0 %1438
  %v1441 = vmul.f32 %v1439, %v1074
  %s1442 = scalar_lea.vmem %s3, 24
  %v1443 = vld [vmem:[%s1442] sm:$0xf]
  %1445 = vset.pattern.permute.xlu0 0
  %1446 = vperm.xlu0 %1445, %v1443
  %v1447 = vpop.permute.xlu0 %1446
  %v1449 = vmul.f32 %v1447, %v1224
  %v1450 = vadd.f32 %v1441, %v1449
  %s1451 = scalar_lea.vmem %s3, 40
  %v1452 = vld [vmem:[%s1451] sm:$0xf]
  %1454 = vset.pattern.permute.xlu0 0
  %1455 = vperm.xlu0 %1454, %v1452
  %v1456 = vpop.permute.xlu0 %1455
  %v1458 = vmul.f32 %v1456, %v1229
  %v1459 = vadd.f32 %v1450, %v1458
  %s1460 = scalar_lea.vmem %s3, 56
  %v1461 = vld [vmem:[%s1460] sm:$0xf]
  %1463 = vset.pattern.permute.xlu0 0
  %1464 = vperm.xlu0 %1463, %v1461
  %v1465 = vpop.permute.xlu0 %1464
  %v1467 = vmul.f32 %v1465, %v1234
  %v1468 = vadd.f32 %v1459, %v1467
  %s1469 = scalar_lea.vmem %s3, 72
  %v1470 = vld [vmem:[%s1469] sm:$0xf]
  %1472 = vset.pattern.permute.xlu0 0
  %1473 = vperm.xlu0 %1472, %v1470
  %v1474 = vpop.permute.xlu0 %1473
  %v1476 = vmul.f32 %v1474, %v1239
  %v1477 = vadd.f32 %v1468, %v1476
  %s1478 = scalar_lea.vmem %s3, 88
  %v1479 = vld [vmem:[%s1478] sm:$0xf]
  %1481 = vset.pattern.permute.xlu0 0
  %1482 = vperm.xlu0 %1481, %v1479
  %v1483 = vpop.permute.xlu0 %1482
  %v1485 = vmul.f32 %v1483, %v1244
  %v1486 = vadd.f32 %v1477, %v1485
  %s1487 = scalar_lea.vmem %s3, 104
  %v1488 = vld [vmem:[%s1487] sm:$0xf]
  %1490 = vset.pattern.permute.xlu0 0
  %1491 = vperm.xlu0 %1490, %v1488
  %v1492 = vpop.permute.xlu0 %1491
  %v1494 = vmul.f32 %v1492, %v1249
  %v1495 = vadd.f32 %v1486, %v1494
  %s1496 = scalar_lea.vmem %s3, 120
  %v1497 = vld [vmem:[%s1496] sm:$0xf]
  %1499 = vset.pattern.permute.xlu0 0
  %1500 = vperm.xlu0 %1499, %v1497
  %v1501 = vpop.permute.xlu0 %1500
  %v1503 = vmul.f32 %v1501, %v1254
  %v1504 = vadd.f32 %v1495, %v1503
  %s1505 = scalar_lea.vmem %s3, 136
  %v1506 = vld [vmem:[%s1505] sm:$0xf]
  %1508 = vset.pattern.permute.xlu0 0
  %1509 = vperm.xlu0 %1508, %v1506
  %v1510 = vpop.permute.xlu0 %1509
  %v1512 = vmul.f32 %v1510, %v1259
  %v1513 = vadd.f32 %v1504, %v1512
  %v1514 = vsel %vm1339, %v1513, 0.0
  %v1515 = vrot.slane %v1514, 4
  %v1516 = vadd.f32 %v1514, %v1515
  %v1517 = vrot.slane %v1516, 2
  %v1518 = vadd.f32 %v1516, %v1517
  %v1519 = vrot.slane %v1518, 1
  %v1520 = vadd.f32 %v1518, %v1519
  %s1521 = scalar_lea.vmem %s3, 12
  %v1522 = vld [vmem:[%s1521] sm:$0xf]
  %1524 = vset.pattern.permute.xlu0 0
  %1525 = vperm.xlu0 %1524, %v1522
  %v1526 = vpop.permute.xlu0 %1525
  %v1528 = vmul.f32 %v1526, %v1074
  %s1529 = scalar_lea.vmem %s3, 28
  %v1530 = vld [vmem:[%s1529] sm:$0xf]
  %1532 = vset.pattern.permute.xlu0 0
  %1533 = vperm.xlu0 %1532, %v1530
  %v1534 = vpop.permute.xlu0 %1533
  %v1536 = vmul.f32 %v1534, %v1224
  %v1537 = vadd.f32 %v1528, %v1536
  %s1538 = scalar_lea.vmem %s3, 44
  %v1539 = vld [vmem:[%s1538] sm:$0xf]
  %1541 = vset.pattern.permute.xlu0 0
  %1542 = vperm.xlu0 %1541, %v1539
  %v1543 = vpop.permute.xlu0 %1542
  %v1545 = vmul.f32 %v1543, %v1229
  %v1546 = vadd.f32 %v1537, %v1545
  %s1547 = scalar_lea.vmem %s3, 60
  %v1548 = vld [vmem:[%s1547] sm:$0xf]
  %1550 = vset.pattern.permute.xlu0 0
  %1551 = vperm.xlu0 %1550, %v1548
  %v1552 = vpop.permute.xlu0 %1551
  %v1554 = vmul.f32 %v1552, %v1234
  %v1555 = vadd.f32 %v1546, %v1554
  %s1556 = scalar_lea.vmem %s3, 76
  %v1557 = vld [vmem:[%s1556] sm:$0xf]
  %1559 = vset.pattern.permute.xlu0 0
  %1560 = vperm.xlu0 %1559, %v1557
  %v1561 = vpop.permute.xlu0 %1560
  %v1563 = vmul.f32 %v1561, %v1239
  %v1564 = vadd.f32 %v1555, %v1563
  %s1565 = scalar_lea.vmem %s3, 92
  %v1566 = vld [vmem:[%s1565] sm:$0xf]
  %1568 = vset.pattern.permute.xlu0 0
  %1569 = vperm.xlu0 %1568, %v1566
  %v1570 = vpop.permute.xlu0 %1569
  %v1572 = vmul.f32 %v1570, %v1244
  %v1573 = vadd.f32 %v1564, %v1572
  %s1574 = scalar_lea.vmem %s3, 108
  %v1575 = vld [vmem:[%s1574] sm:$0xf]
  %1577 = vset.pattern.permute.xlu0 0
  %1578 = vperm.xlu0 %1577, %v1575
  %v1579 = vpop.permute.xlu0 %1578
  %v1581 = vmul.f32 %v1579, %v1249
  %v1582 = vadd.f32 %v1573, %v1581
  %s1583 = scalar_lea.vmem %s3, 124
  %v1584 = vld [vmem:[%s1583] sm:$0xf]
  %1586 = vset.pattern.permute.xlu0 0
  %1587 = vperm.xlu0 %1586, %v1584
  %v1588 = vpop.permute.xlu0 %1587
  %v1590 = vmul.f32 %v1588, %v1254
  %v1591 = vadd.f32 %v1582, %v1590
  %s1592 = scalar_lea.vmem %s3, 140
  %v1593 = vld [vmem:[%s1592] sm:$0xf]
  %1595 = vset.pattern.permute.xlu0 0
  %1596 = vperm.xlu0 %1595, %v1593
  %v1597 = vpop.permute.xlu0 %1596
  %v1599 = vmul.f32 %v1597, %v1259
  %v1600 = vadd.f32 %v1591, %v1599
  %v1601 = vsel %vm1339, %v1600, 0.0
  %v1602 = vrot.slane %v1601, 4
  %v1603 = vadd.f32 %v1601, %v1602
  %v1604 = vrot.slane %v1603, 2
  %v1605 = vadd.f32 %v1603, %v1604
  %v1606 = vrot.slane %v1605, 1
  %v1607 = vadd.f32 %v1605, %v1606
  %vm1608 = vcmask 1040384
  %v1609 = vsel %vm1608, %v1346, %v1433
  %vm1610 = vcmask 1041408
  %v1611 = vsel %vm1610, %v1609, %v1520
  %vm1612 = vcmask 1042432
  %v1613 = vsel %vm1612, %v1611, %v1607
  %v1614 = vld [vmem:[%s4] sm:$0xf]
  %1616 = vset.pattern.permute.xlu0 0
  %1617 = vperm.xlu0 %1616, %v1614
  %v1618 = vpop.permute.xlu0 %1617
  %v1620 = vadd.f32 %v1613, %v1618
  %1621 = vst [vmem:[%s5] sm:$0xf] %v1620
  // Predicated region
  $region22: #{class_vec_forward.1} parent=0 // pred_check
    _
  $region23: #{class_vec_forward.1} parent=0 // pred_check_branch
    %1623 = sbr.rel (0) target = $region25
  $region24: #{class_vec_forward.1} parent=0 // pred_region
    _
  $region25: #{class_vec_forward.1} parent=0 // pred_fallthru
    _
  // Predicated region
  $region26: #{class_vec_forward.1} parent=0 // pred_check
    _
  $region27: #{class_vec_forward.1} parent=0 // pred_check_branch
    %1625 = sbr.rel (0) target = $region29
  $region28: #{class_vec_forward.1} parent=0 // pred_region
    _
  $region29: #{class_vec_forward.1} parent=0 // pred_fallthru
    _

</llo_original>
